<compile_context>
chip_gen: v6e
topology: v6e:2x2x1
jax: 0.10.0
libtpu: 0.0.40
codegen_flags: <defaults>
</compile_context>

<pallas_src>
import functools

import jax
import jax.numpy as jnp
from jax.experimental import pallas as pl
from jax.experimental.pallas import tpu as pltpu  # noqa: F401  (kept for parity)


# ----------------------------------------------------------------------------
# Fused Pallas kernel: LSTM layer 0 || LSTM layer 1 (pipelined) -> Linear(H,1)
# ----------------------------------------------------------------------------
def fused_lstm_kernel(xf_ref, wi0_ref, wh0_ref, b0_ref,
                      w1_ref, b1_ref,
                      wfc_ref, bfc_ref,
                      out_ref,
                      *, T, B, H):
    """xf rows are time-major flattened: row index = t*B + b.

    Gate order (i, f, g, o) and folded b_ih + b_hh bias match torch.nn.LSTM.
    w1_ref holds [Wi1; Wh1] stacked to (2H, 4H) for a single per-step push.
    """
    f32 = jnp.float32

    def cell_step(gates, c_prev):
        # Two full-vreg EUP pushes over the whole (B, 4H) gate vreg, then pick
        # the i/f/g/o lane blocks with static slices (cheap VPU/XLU selects).
        sg = jax.nn.sigmoid(gates)                 # lanes: [sig i|sig f| * |sig o]
        tg = jnp.tanh(gates)                       # lanes: [  *  |  *  |tanh g| * ]
        i = sg[:, 0 * H:1 * H]
        f = sg[:, 1 * H:2 * H]
        g = tg[:, 2 * H:3 * H]
        o = sg[:, 3 * H:4 * H]
        c_new = f * c_prev + i * g
        h_new = o * jnp.tanh(c_new)
        return h_new, c_new

    # ---- layer-0 input projection hoisted out of the recurrence -----------
    gx0 = (jnp.dot(xf_ref[...], wi0_ref[...], preferred_element_type=f32)
           + b0_ref[...])                                  # (T*B, 4H)
    # TODO(synk): a (T, B, 4H) reshape would make per-step extraction a
    # leading-axis index; kept as static row slices (the XLU has slack here).

    wh0 = wh0_ref[...]                                     # (H, 4H)
    w1 = w1_ref[...]                                       # (2H, 4H) = [Wi1; Wh1]
    b1 = jnp.broadcast_to(b1_ref[...], (B, 4 * H))         # hoisted broadcast

    def layer1_step(h0_t, h1_prev, c1_prev):
        # Single MXU push: [h0_t | h1_{t-1}] (B, 2H) @ (2H, 4H) + bias.
        lhs = jnp.concatenate([h0_t, h1_prev], axis=-1)
        gates1 = jnp.dot(lhs, w1, preferred_element_type=f32) + b1
        return cell_step(gates1, c1_prev)

    h0 = jnp.zeros((B, H), f32)
    c0 = jnp.zeros((B, H), f32)
    h1 = jnp.zeros((B, H), f32)
    c1 = jnp.zeros((B, H), f32)

    # ---- software-pipelined recurrence (statically unrolled) --------------
    # Iteration t computes layer-0 step t and layer-1 step t-1.  The two
    # cells sit on independent dependency chains (layer-1 step t-1 needs only
    # h0_{t-1}), so their MXU/EUP/VPU work overlaps and the critical path is
    # ~T+1 cell steps instead of 2T.
    for t in range(T):
        gates0 = (gx0[t * B:(t + 1) * B, :]
                  + jnp.dot(h0, wh0, preferred_element_type=f32))
        h0_new, c0 = cell_step(gates0, c0)
        if t >= 1:
            h1, c1 = layer1_step(h0, h1, c1)               # consumes h0_{t-1}
        h0 = h0_new
    # pipeline drain: layer-1 step for the final timestep
    h1, c1 = layer1_step(h0, h1, c1)

    # ---- FC head on last-timestep hidden: VPU mul + lane reduction --------
    out_ref[...] = (jnp.sum(h1 * wfc_ref[...], axis=-1, keepdims=True)
                    + bfc_ref[...])                        # (B, 1)


# ----------------------------------------------------------------------------
# Wrapper (one pallas_call, no grid — everything resident in VMEM)
# ----------------------------------------------------------------------------
def lstm_model_pallas(x_btd, params):
    """x_btd: (B, T, input_size) batch_first, as in PyTorch."""
    B, T, D = x_btd.shape
    H = params["wh0"].shape[0]
    # Time-major flattened rows (row = t*B + b): contiguous per-step blocks.
    x_flat = jnp.transpose(x_btd, (1, 0, 2)).reshape(T * B, D)
    # Stack layer-1 input & recurrent weights so the per-step layer-1 gate
    # matmul is a single MXU push against [h0_t | h1_{t-1}].
    w1 = jnp.concatenate([params["wi1"], params["wh1"]], axis=0)   # (2H, 4H)
    kernel = functools.partial(fused_lstm_kernel, T=T, B=B, H=H)
    return pl.pallas_call(
        kernel,
        out_shape=jax.ShapeDtypeStruct((B, 1), jnp.float32),
    )(x_flat,
      params["wi0"], params["wh0"], params["b0"],
      w1, params["b1"],
      params["w_fc"], params["b_fc"])


lstm_model_forward = jax.jit(lstm_model_pallas)


# ----------------------------------------------------------------------------
# Pure-JAX reference (PyTorch nn.LSTM semantics) for verification
# ----------------------------------------------------------------------------
def lstm_model_ref(x_btd, params):
    B, T, _ = x_btd.shape
    H = params["wh0"].shape[0]

    def run_layer(x_seq, wi, wh, b):   # x_seq: (B, T, D)
        h = jnp.zeros((B, H), jnp.float32)
        c = jnp.zeros((B, H), jnp.float32)
        outs = []
        for t in range(T):
            gates = x_seq[:, t, :] @ wi + h @ wh + b
            i = jax.nn.sigmoid(gates[:, 0 * H:1 * H])
            f = jax.nn.sigmoid(gates[:, 1 * H:2 * H])
            g = jnp.tanh(gates[:, 2 * H:3 * H])
            o = jax.nn.sigmoid(gates[:, 3 * H:4 * H])
            c = f * c + i * g
            h = o * jnp.tanh(c)
            outs.append(h)
        return jnp.stack(outs, axis=1)             # (B, T, H)

    h1 = run_layer(x_btd, params["wi0"], params["wh0"], params["b0"])
    h2 = run_layer(h1, params["wi1"], params["wh1"], params["b1"])
    return h2[:, -1, :] @ params["w_fc"].T + params["b_fc"]


# ----------------------------------------------------------------------------
# Deterministic parameter construction (synthetic; mirrors __init__ shapes,
# pre-transposed to (D, 4H)/(H, 4H) so the kernel does plain x @ W)
# ----------------------------------------------------------------------------
def make_params(key, input_size, hidden_size):
    ks = jax.random.split(key, 8)
    s = 1.0 / jnp.sqrt(hidden_size)

    def u(k, shape):
        return jax.random.uniform(k, shape, jnp.float32, -s, s)

    H = hidden_size
    return {
        # layer 0: W_ih (4H, D) / W_hh (4H, H) stored transposed for x @ W
        "wi0": u(ks[0], (input_size, 4 * H)),
        "wh0": u(ks[1], (H, 4 * H)),
        "b0": u(ks[2], (1, 4 * H)),     # b_ih + b_hh folded
        # layer 1: input is previous layer's hidden (size H)
        "wi1": u(ks[3], (H, 4 * H)),
        "wh1": u(ks[4], (H, 4 * H)),
        "b1": u(ks[5], (1, 4 * H)),
        # fc: Linear(H, 1) stored as a (1, H) row vector (VPU mul + lane sum)
        "w_fc": u(ks[6], (1, H)),
        "b_fc": u(ks[7], (1, 1)),
    }


if __name__ == "__main__":
    B, T, INPUT_SIZE, HIDDEN = 2, 8, 4, 32   # small shapes, num_layers = 2

    key = jax.random.PRNGKey(0)
    k_x, k_p = jax.random.split(key)
    x = jax.random.normal(k_x, (B, T, INPUT_SIZE), jnp.float32)
    params = make_params(k_p, INPUT_SIZE, HIDDEN)

    out = lstm_model_forward(x, params)
    out = jax.block_until_ready(out)

    ref = lstm_model_ref(x, params)
    assert out.shape == (B, 1)
    assert jnp.allclose(out, ref, rtol=1e-4, atol=1e-5), (out, ref)

    print("KERNEL_OK")
</pallas_src>

<mosaic_0001>
module attributes {stable_mosaic.version = 11 : i64} {
  func.func @fused_lstm_kernel(%arg0: memref<16x4xf32, #tpu.memory_space<vmem>>, %arg1: memref<4x128xf32, #tpu.memory_space<vmem>>, %arg2: memref<32x128xf32, #tpu.memory_space<vmem>>, %arg3: memref<1x128xf32, #tpu.memory_space<vmem>>, %arg4: memref<64x128xf32, #tpu.memory_space<vmem>>, %arg5: memref<1x128xf32, #tpu.memory_space<vmem>>, %arg6: memref<1x32xf32, #tpu.memory_space<vmem>>, %arg7: memref<1x1xf32, #tpu.memory_space<vmem>>, %arg8: memref<2x1xf32, #tpu.memory_space<vmem>>) attributes {dimension_semantics = [], scalar_prefetch = 0 : i64, scratch_operands = 0 : i64, tpu.core_type = #tpu.core_type<tc>} {
    %c0 = arith.constant 0 : index
    %c0_0 = arith.constant 0 : index
    %0 = vector.load %arg0[%c0, %c0_0] : memref<16x4xf32, #tpu.memory_space<vmem>>, vector<16x4xf32>
    %c0_1 = arith.constant 0 : index
    %c0_2 = arith.constant 0 : index
    %1 = vector.load %arg1[%c0_1, %c0_2] : memref<4x128xf32, #tpu.memory_space<vmem>>, vector<4x128xf32>
    %cst = arith.constant dense<0.000000e+00> : vector<16x128xf32>
    %2 = tpu.matmul %0, %1, %cst {dimension_numbers = #tpu.dot_dimension_numbers<[1], [0], [0], [1], [0, 0, 1, 1], [], []>} : vector<16x4xf32>, vector<4x128xf32>, vector<16x128xf32> -> vector<16x128xf32>
    %c0_3 = arith.constant 0 : index
    %c0_4 = arith.constant 0 : index
    %3 = vector.load %arg3[%c0_3, %c0_4] : memref<1x128xf32, #tpu.memory_space<vmem>>, vector<1x128xf32>
    %4 = vector.broadcast %3 : vector<1x128xf32> to vector<16x128xf32>
    %5 = arith.addf %2, %4 : vector<16x128xf32>
    %c0_5 = arith.constant 0 : index
    %c0_6 = arith.constant 0 : index
    %6 = vector.load %arg2[%c0_5, %c0_6] : memref<32x128xf32, #tpu.memory_space<vmem>>, vector<32x128xf32>
    %c0_7 = arith.constant 0 : index
    %c0_8 = arith.constant 0 : index
    %7 = vector.load %arg4[%c0_7, %c0_8] : memref<64x128xf32, #tpu.memory_space<vmem>>, vector<64x128xf32>
    %c0_9 = arith.constant 0 : index
    %c0_10 = arith.constant 0 : index
    %8 = vector.load %arg5[%c0_9, %c0_10] : memref<1x128xf32, #tpu.memory_space<vmem>>, vector<1x128xf32>
    %9 = vector.shape_cast %8 : vector<1x128xf32> to vector<1x128xf32>
    %10 = vector.broadcast %9 : vector<1x128xf32> to vector<2x128xf32>
    %cst_11 = arith.constant 0.000000e+00 : f32
    %11 = vector.broadcast %cst_11 : f32 to vector<2x32xf32>
    %cst_12 = arith.constant 0.000000e+00 : f32
    %12 = vector.broadcast %cst_12 : f32 to vector<2x32xf32>
    %cst_13 = arith.constant 0.000000e+00 : f32
    %13 = vector.broadcast %cst_13 : f32 to vector<2x32xf32>
    %cst_14 = arith.constant 0.000000e+00 : f32
    %14 = vector.broadcast %cst_14 : f32 to vector<2x32xf32>
    %15 = vector.extract_strided_slice %5 {offsets = [0, 0], sizes = [2, 128], strides = [1, 1]} : vector<16x128xf32> to vector<2x128xf32>
    %cst_15 = arith.constant dense<0.000000e+00> : vector<2x128xf32>
    %16 = tpu.matmul %11, %6, %cst_15 {dimension_numbers = #tpu.dot_dimension_numbers<[1], [0], [0], [1], [0, 0, 1, 1], [], []>} : vector<2x32xf32>, vector<32x128xf32>, vector<2x128xf32> -> vector<2x128xf32>
    %17 = arith.addf %15, %16 : vector<2x128xf32>
    %18 = arith.negf %17 : vector<2x128xf32>
    %19 = math.exp %18 : vector<2x128xf32>
    %cst_16 = arith.constant 1.000000e+00 : f32
    %20 = vector.broadcast %cst_16 : f32 to vector<2x128xf32>
    %21 = arith.addf %20, %19 : vector<2x128xf32>
    %22 = arith.divf %20, %21 : vector<2x128xf32>
    %23 = math.tanh %17 : vector<2x128xf32>
    %24 = vector.extract_strided_slice %22 {offsets = [0, 0], sizes = [2, 32], strides = [1, 1]} : vector<2x128xf32> to vector<2x32xf32>
    %25 = vector.extract_strided_slice %22 {offsets = [0, 32], sizes = [2, 32], strides = [1, 1]} : vector<2x128xf32> to vector<2x32xf32>
    %26 = vector.extract_strided_slice %23 {offsets = [0, 64], sizes = [2, 32], strides = [1, 1]} : vector<2x128xf32> to vector<2x32xf32>
    %27 = vector.extract_strided_slice %22 {offsets = [0, 96], sizes = [2, 32], strides = [1, 1]} : vector<2x128xf32> to vector<2x32xf32>
    %28 = arith.mulf %25, %12 : vector<2x32xf32>
    %29 = arith.mulf %24, %26 : vector<2x32xf32>
    %30 = arith.addf %28, %29 : vector<2x32xf32>
    %31 = math.tanh %30 : vector<2x32xf32>
    %32 = arith.mulf %27, %31 : vector<2x32xf32>
    %33 = vector.extract_strided_slice %5 {offsets = [2, 0], sizes = [2, 128], strides = [1, 1]} : vector<16x128xf32> to vector<2x128xf32>
    %cst_17 = arith.constant dense<0.000000e+00> : vector<2x128xf32>
    %34 = tpu.matmul %32, %6, %cst_17 {dimension_numbers = #tpu.dot_dimension_numbers<[1], [0], [0], [1], [0, 0, 1, 1], [], []>} : vector<2x32xf32>, vector<32x128xf32>, vector<2x128xf32> -> vector<2x128xf32>
    %35 = arith.addf %33, %34 : vector<2x128xf32>
    %36 = arith.negf %35 : vector<2x128xf32>
    %37 = math.exp %36 : vector<2x128xf32>
    %cst_18 = arith.constant 1.000000e+00 : f32
    %38 = vector.broadcast %cst_18 : f32 to vector<2x128xf32>
    %39 = arith.addf %38, %37 : vector<2x128xf32>
    %40 = arith.divf %38, %39 : vector<2x128xf32>
    %41 = math.tanh %35 : vector<2x128xf32>
    %42 = vector.extract_strided_slice %40 {offsets = [0, 0], sizes = [2, 32], strides = [1, 1]} : vector<2x128xf32> to vector<2x32xf32>
    %43 = vector.extract_strided_slice %40 {offsets = [0, 32], sizes = [2, 32], strides = [1, 1]} : vector<2x128xf32> to vector<2x32xf32>
    %44 = vector.extract_strided_slice %41 {offsets = [0, 64], sizes = [2, 32], strides = [1, 1]} : vector<2x128xf32> to vector<2x32xf32>
    %45 = vector.extract_strided_slice %40 {offsets = [0, 96], sizes = [2, 32], strides = [1, 1]} : vector<2x128xf32> to vector<2x32xf32>
    %46 = arith.mulf %43, %30 : vector<2x32xf32>
    %47 = arith.mulf %42, %44 : vector<2x32xf32>
    %48 = arith.addf %46, %47 : vector<2x32xf32>
    %49 = math.tanh %48 : vector<2x32xf32>
    %50 = arith.mulf %45, %49 : vector<2x32xf32>
    %51 = tpu.concatenate %32, %13 in 1 : vector<2x32xf32>, vector<2x32xf32> -> vector<2x64xf32>
    %cst_19 = arith.constant dense<0.000000e+00> : vector<2x128xf32>
    %52 = tpu.matmul %51, %7, %cst_19 {dimension_numbers = #tpu.dot_dimension_numbers<[1], [0], [0], [1], [0, 0, 1, 1], [], []>} : vector<2x64xf32>, vector<64x128xf32>, vector<2x128xf32> -> vector<2x128xf32>
    %53 = arith.addf %52, %10 : vector<2x128xf32>
    %54 = arith.negf %53 : vector<2x128xf32>
    %55 = math.exp %54 : vector<2x128xf32>
    %cst_20 = arith.constant 1.000000e+00 : f32
    %56 = vector.broadcast %cst_20 : f32 to vector<2x128xf32>
    %57 = arith.addf %56, %55 : vector<2x128xf32>
    %58 = arith.divf %56, %57 : vector<2x128xf32>
    %59 = math.tanh %53 : vector<2x128xf32>
    %60 = vector.extract_strided_slice %58 {offsets = [0, 0], sizes = [2, 32], strides = [1, 1]} : vector<2x128xf32> to vector<2x32xf32>
    %61 = vector.extract_strided_slice %58 {offsets = [0, 32], sizes = [2, 32], strides = [1, 1]} : vector<2x128xf32> to vector<2x32xf32>
    %62 = vector.extract_strided_slice %59 {offsets = [0, 64], sizes = [2, 32], strides = [1, 1]} : vector<2x128xf32> to vector<2x32xf32>
    %63 = vector.extract_strided_slice %58 {offsets = [0, 96], sizes = [2, 32], strides = [1, 1]} : vector<2x128xf32> to vector<2x32xf32>
    %64 = arith.mulf %61, %14 : vector<2x32xf32>
    %65 = arith.mulf %60, %62 : vector<2x32xf32>
    %66 = arith.addf %64, %65 : vector<2x32xf32>
    %67 = math.tanh %66 : vector<2x32xf32>
    %68 = arith.mulf %63, %67 : vector<2x32xf32>
    %69 = vector.extract_strided_slice %5 {offsets = [4, 0], sizes = [2, 128], strides = [1, 1]} : vector<16x128xf32> to vector<2x128xf32>
    %cst_21 = arith.constant dense<0.000000e+00> : vector<2x128xf32>
    %70 = tpu.matmul %50, %6, %cst_21 {dimension_numbers = #tpu.dot_dimension_numbers<[1], [0], [0], [1], [0, 0, 1, 1], [], []>} : vector<2x32xf32>, vector<32x128xf32>, vector<2x128xf32> -> vector<2x128xf32>
    %71 = arith.addf %69, %70 : vector<2x128xf32>
    %72 = arith.negf %71 : vector<2x128xf32>
    %73 = math.exp %72 : vector<2x128xf32>
    %cst_22 = arith.constant 1.000000e+00 : f32
    %74 = vector.broadcast %cst_22 : f32 to vector<2x128xf32>
    %75 = arith.addf %74, %73 : vector<2x128xf32>
    %76 = arith.divf %74, %75 : vector<2x128xf32>
    %77 = math.tanh %71 : vector<2x128xf32>
    %78 = vector.extract_strided_slice %76 {offsets = [0, 0], sizes = [2, 32], strides = [1, 1]} : vector<2x128xf32> to vector<2x32xf32>
    %79 = vector.extract_strided_slice %76 {offsets = [0, 32], sizes = [2, 32], strides = [1, 1]} : vector<2x128xf32> to vector<2x32xf32>
    %80 = vector.extract_strided_slice %77 {offsets = [0, 64], sizes = [2, 32], strides = [1, 1]} : vector<2x128xf32> to vector<2x32xf32>
    %81 = vector.extract_strided_slice %76 {offsets = [0, 96], sizes = [2, 32], strides = [1, 1]} : vector<2x128xf32> to vector<2x32xf32>
    %82 = arith.mulf %79, %48 : vector<2x32xf32>
    %83 = arith.mulf %78, %80 : vector<2x32xf32>
    %84 = arith.addf %82, %83 : vector<2x32xf32>
    %85 = math.tanh %84 : vector<2x32xf32>
    %86 = arith.mulf %81, %85 : vector<2x32xf32>
    %87 = tpu.concatenate %50, %68 in 1 : vector<2x32xf32>, vector<2x32xf32> -> vector<2x64xf32>
    %cst_23 = arith.constant dense<0.000000e+00> : vector<2x128xf32>
    %88 = tpu.matmul %87, %7, %cst_23 {dimension_numbers = #tpu.dot_dimension_numbers<[1], [0], [0], [1], [0, 0, 1, 1], [], []>} : vector<2x64xf32>, vector<64x128xf32>, vector<2x128xf32> -> vector<2x128xf32>
    %89 = arith.addf %88, %10 : vector<2x128xf32>
    %90 = arith.negf %89 : vector<2x128xf32>
    %91 = math.exp %90 : vector<2x128xf32>
    %cst_24 = arith.constant 1.000000e+00 : f32
    %92 = vector.broadcast %cst_24 : f32 to vector<2x128xf32>
    %93 = arith.addf %92, %91 : vector<2x128xf32>
    %94 = arith.divf %92, %93 : vector<2x128xf32>
    %95 = math.tanh %89 : vector<2x128xf32>
    %96 = vector.extract_strided_slice %94 {offsets = [0, 0], sizes = [2, 32], strides = [1, 1]} : vector<2x128xf32> to vector<2x32xf32>
    %97 = vector.extract_strided_slice %94 {offsets = [0, 32], sizes = [2, 32], strides = [1, 1]} : vector<2x128xf32> to vector<2x32xf32>
    %98 = vector.extract_strided_slice %95 {offsets = [0, 64], sizes = [2, 32], strides = [1, 1]} : vector<2x128xf32> to vector<2x32xf32>
    %99 = vector.extract_strided_slice %94 {offsets = [0, 96], sizes = [2, 32], strides = [1, 1]} : vector<2x128xf32> to vector<2x32xf32>
    %100 = arith.mulf %97, %66 : vector<2x32xf32>
    %101 = arith.mulf %96, %98 : vector<2x32xf32>
    %102 = arith.addf %100, %101 : vector<2x32xf32>
    %103 = math.tanh %102 : vector<2x32xf32>
    %104 = arith.mulf %99, %103 : vector<2x32xf32>
    %105 = vector.extract_strided_slice %5 {offsets = [6, 0], sizes = [2, 128], strides = [1, 1]} : vector<16x128xf32> to vector<2x128xf32>
    %cst_25 = arith.constant dense<0.000000e+00> : vector<2x128xf32>
    %106 = tpu.matmul %86, %6, %cst_25 {dimension_numbers = #tpu.dot_dimension_numbers<[1], [0], [0], [1], [0, 0, 1, 1], [], []>} : vector<2x32xf32>, vector<32x128xf32>, vector<2x128xf32> -> vector<2x128xf32>
    %107 = arith.addf %105, %106 : vector<2x128xf32>
    %108 = arith.negf %107 : vector<2x128xf32>
    %109 = math.exp %108 : vector<2x128xf32>
    %cst_26 = arith.constant 1.000000e+00 : f32
    %110 = vector.broadcast %cst_26 : f32 to vector<2x128xf32>
    %111 = arith.addf %110, %109 : vector<2x128xf32>
    %112 = arith.divf %110, %111 : vector<2x128xf32>
    %113 = math.tanh %107 : vector<2x128xf32>
    %114 = vector.extract_strided_slice %112 {offsets = [0, 0], sizes = [2, 32], strides = [1, 1]} : vector<2x128xf32> to vector<2x32xf32>
    %115 = vector.extract_strided_slice %112 {offsets = [0, 32], sizes = [2, 32], strides = [1, 1]} : vector<2x128xf32> to vector<2x32xf32>
    %116 = vector.extract_strided_slice %113 {offsets = [0, 64], sizes = [2, 32], strides = [1, 1]} : vector<2x128xf32> to vector<2x32xf32>
    %117 = vector.extract_strided_slice %112 {offsets = [0, 96], sizes = [2, 32], strides = [1, 1]} : vector<2x128xf32> to vector<2x32xf32>
    %118 = arith.mulf %115, %84 : vector<2x32xf32>
    %119 = arith.mulf %114, %116 : vector<2x32xf32>
    %120 = arith.addf %118, %119 : vector<2x32xf32>
    %121 = math.tanh %120 : vector<2x32xf32>
    %122 = arith.mulf %117, %121 : vector<2x32xf32>
    %123 = tpu.concatenate %86, %104 in 1 : vector<2x32xf32>, vector<2x32xf32> -> vector<2x64xf32>
    %cst_27 = arith.constant dense<0.000000e+00> : vector<2x128xf32>
    %124 = tpu.matmul %123, %7, %cst_27 {dimension_numbers = #tpu.dot_dimension_numbers<[1], [0], [0], [1], [0, 0, 1, 1], [], []>} : vector<2x64xf32>, vector<64x128xf32>, vector<2x128xf32> -> vector<2x128xf32>
    %125 = arith.addf %124, %10 : vector<2x128xf32>
    %126 = arith.negf %125 : vector<2x128xf32>
    %127 = math.exp %126 : vector<2x128xf32>
    %cst_28 = arith.constant 1.000000e+00 : f32
    %128 = vector.broadcast %cst_28 : f32 to vector<2x128xf32>
    %129 = arith.addf %128, %127 : vector<2x128xf32>
    %130 = arith.divf %128, %129 : vector<2x128xf32>
    %131 = math.tanh %125 : vector<2x128xf32>
    %132 = vector.extract_strided_slice %130 {offsets = [0, 0], sizes = [2, 32], strides = [1, 1]} : vector<2x128xf32> to vector<2x32xf32>
    %133 = vector.extract_strided_slice %130 {offsets = [0, 32], sizes = [2, 32], strides = [1, 1]} : vector<2x128xf32> to vector<2x32xf32>
    %134 = vector.extract_strided_slice %131 {offsets = [0, 64], sizes = [2, 32], strides = [1, 1]} : vector<2x128xf32> to vector<2x32xf32>
    %135 = vector.extract_strided_slice %130 {offsets = [0, 96], sizes = [2, 32], strides = [1, 1]} : vector<2x128xf32> to vector<2x32xf32>
    %136 = arith.mulf %133, %102 : vector<2x32xf32>
    %137 = arith.mulf %132, %134 : vector<2x32xf32>
    %138 = arith.addf %136, %137 : vector<2x32xf32>
    %139 = math.tanh %138 : vector<2x32xf32>
    %140 = arith.mulf %135, %139 : vector<2x32xf32>
    %141 = vector.extract_strided_slice %5 {offsets = [8, 0], sizes = [2, 128], strides = [1, 1]} : vector<16x128xf32> to vector<2x128xf32>
    %cst_29 = arith.constant dense<0.000000e+00> : vector<2x128xf32>
    %142 = tpu.matmul %122, %6, %cst_29 {dimension_numbers = #tpu.dot_dimension_numbers<[1], [0], [0], [1], [0, 0, 1, 1], [], []>} : vector<2x32xf32>, vector<32x128xf32>, vector<2x128xf32> -> vector<2x128xf32>
    %143 = arith.addf %141, %142 : vector<2x128xf32>
    %144 = arith.negf %143 : vector<2x128xf32>
    %145 = math.exp %144 : vector<2x128xf32>
    %cst_30 = arith.constant 1.000000e+00 : f32
    %146 = vector.broadcast %cst_30 : f32 to vector<2x128xf32>
    %147 = arith.addf %146, %145 : vector<2x128xf32>
    %148 = arith.divf %146, %147 : vector<2x128xf32>
    %149 = math.tanh %143 : vector<2x128xf32>
    %150 = vector.extract_strided_slice %148 {offsets = [0, 0], sizes = [2, 32], strides = [1, 1]} : vector<2x128xf32> to vector<2x32xf32>
    %151 = vector.extract_strided_slice %148 {offsets = [0, 32], sizes = [2, 32], strides = [1, 1]} : vector<2x128xf32> to vector<2x32xf32>
    %152 = vector.extract_strided_slice %149 {offsets = [0, 64], sizes = [2, 32], strides = [1, 1]} : vector<2x128xf32> to vector<2x32xf32>
    %153 = vector.extract_strided_slice %148 {offsets = [0, 96], sizes = [2, 32], strides = [1, 1]} : vector<2x128xf32> to vector<2x32xf32>
    %154 = arith.mulf %151, %120 : vector<2x32xf32>
    %155 = arith.mulf %150, %152 : vector<2x32xf32>
    %156 = arith.addf %154, %155 : vector<2x32xf32>
    %157 = math.tanh %156 : vector<2x32xf32>
    %158 = arith.mulf %153, %157 : vector<2x32xf32>
    %159 = tpu.concatenate %122, %140 in 1 : vector<2x32xf32>, vector<2x32xf32> -> vector<2x64xf32>
    %cst_31 = arith.constant dense<0.000000e+00> : vector<2x128xf32>
    %160 = tpu.matmul %159, %7, %cst_31 {dimension_numbers = #tpu.dot_dimension_numbers<[1], [0], [0], [1], [0, 0, 1, 1], [], []>} : vector<2x64xf32>, vector<64x128xf32>, vector<2x128xf32> -> vector<2x128xf32>
    %161 = arith.addf %160, %10 : vector<2x128xf32>
    %162 = arith.negf %161 : vector<2x128xf32>
    %163 = math.exp %162 : vector<2x128xf32>
    %cst_32 = arith.constant 1.000000e+00 : f32
    %164 = vector.broadcast %cst_32 : f32 to vector<2x128xf32>
    %165 = arith.addf %164, %163 : vector<2x128xf32>
    %166 = arith.divf %164, %165 : vector<2x128xf32>
    %167 = math.tanh %161 : vector<2x128xf32>
    %168 = vector.extract_strided_slice %166 {offsets = [0, 0], sizes = [2, 32], strides = [1, 1]} : vector<2x128xf32> to vector<2x32xf32>
    %169 = vector.extract_strided_slice %166 {offsets = [0, 32], sizes = [2, 32], strides = [1, 1]} : vector<2x128xf32> to vector<2x32xf32>
    %170 = vector.extract_strided_slice %167 {offsets = [0, 64], sizes = [2, 32], strides = [1, 1]} : vector<2x128xf32> to vector<2x32xf32>
    %171 = vector.extract_strided_slice %166 {offsets = [0, 96], sizes = [2, 32], strides = [1, 1]} : vector<2x128xf32> to vector<2x32xf32>
    %172 = arith.mulf %169, %138 : vector<2x32xf32>
    %173 = arith.mulf %168, %170 : vector<2x32xf32>
    %174 = arith.addf %172, %173 : vector<2x32xf32>
    %175 = math.tanh %174 : vector<2x32xf32>
    %176 = arith.mulf %171, %175 : vector<2x32xf32>
    %177 = vector.extract_strided_slice %5 {offsets = [10, 0], sizes = [2, 128], strides = [1, 1]} : vector<16x128xf32> to vector<2x128xf32>
    %cst_33 = arith.constant dense<0.000000e+00> : vector<2x128xf32>
    %178 = tpu.matmul %158, %6, %cst_33 {dimension_numbers = #tpu.dot_dimension_numbers<[1], [0], [0], [1], [0, 0, 1, 1], [], []>} : vector<2x32xf32>, vector<32x128xf32>, vector<2x128xf32> -> vector<2x128xf32>
    %179 = arith.addf %177, %178 : vector<2x128xf32>
    %180 = arith.negf %179 : vector<2x128xf32>
    %181 = math.exp %180 : vector<2x128xf32>
    %cst_34 = arith.constant 1.000000e+00 : f32
    %182 = vector.broadcast %cst_34 : f32 to vector<2x128xf32>
    %183 = arith.addf %182, %181 : vector<2x128xf32>
    %184 = arith.divf %182, %183 : vector<2x128xf32>
    %185 = math.tanh %179 : vector<2x128xf32>
    %186 = vector.extract_strided_slice %184 {offsets = [0, 0], sizes = [2, 32], strides = [1, 1]} : vector<2x128xf32> to vector<2x32xf32>
    %187 = vector.extract_strided_slice %184 {offsets = [0, 32], sizes = [2, 32], strides = [1, 1]} : vector<2x128xf32> to vector<2x32xf32>
    %188 = vector.extract_strided_slice %185 {offsets = [0, 64], sizes = [2, 32], strides = [1, 1]} : vector<2x128xf32> to vector<2x32xf32>
    %189 = vector.extract_strided_slice %184 {offsets = [0, 96], sizes = [2, 32], strides = [1, 1]} : vector<2x128xf32> to vector<2x32xf32>
    %190 = arith.mulf %187, %156 : vector<2x32xf32>
    %191 = arith.mulf %186, %188 : vector<2x32xf32>
    %192 = arith.addf %190, %191 : vector<2x32xf32>
    %193 = math.tanh %192 : vector<2x32xf32>
    %194 = arith.mulf %189, %193 : vector<2x32xf32>
    %195 = tpu.concatenate %158, %176 in 1 : vector<2x32xf32>, vector<2x32xf32> -> vector<2x64xf32>
    %cst_35 = arith.constant dense<0.000000e+00> : vector<2x128xf32>
    %196 = tpu.matmul %195, %7, %cst_35 {dimension_numbers = #tpu.dot_dimension_numbers<[1], [0], [0], [1], [0, 0, 1, 1], [], []>} : vector<2x64xf32>, vector<64x128xf32>, vector<2x128xf32> -> vector<2x128xf32>
    %197 = arith.addf %196, %10 : vector<2x128xf32>
    %198 = arith.negf %197 : vector<2x128xf32>
    %199 = math.exp %198 : vector<2x128xf32>
    %cst_36 = arith.constant 1.000000e+00 : f32
    %200 = vector.broadcast %cst_36 : f32 to vector<2x128xf32>
    %201 = arith.addf %200, %199 : vector<2x128xf32>
    %202 = arith.divf %200, %201 : vector<2x128xf32>
    %203 = math.tanh %197 : vector<2x128xf32>
    %204 = vector.extract_strided_slice %202 {offsets = [0, 0], sizes = [2, 32], strides = [1, 1]} : vector<2x128xf32> to vector<2x32xf32>
    %205 = vector.extract_strided_slice %202 {offsets = [0, 32], sizes = [2, 32], strides = [1, 1]} : vector<2x128xf32> to vector<2x32xf32>
    %206 = vector.extract_strided_slice %203 {offsets = [0, 64], sizes = [2, 32], strides = [1, 1]} : vector<2x128xf32> to vector<2x32xf32>
    %207 = vector.extract_strided_slice %202 {offsets = [0, 96], sizes = [2, 32], strides = [1, 1]} : vector<2x128xf32> to vector<2x32xf32>
    %208 = arith.mulf %205, %174 : vector<2x32xf32>
    %209 = arith.mulf %204, %206 : vector<2x32xf32>
    %210 = arith.addf %208, %209 : vector<2x32xf32>
    %211 = math.tanh %210 : vector<2x32xf32>
    %212 = arith.mulf %207, %211 : vector<2x32xf32>
    %213 = vector.extract_strided_slice %5 {offsets = [12, 0], sizes = [2, 128], strides = [1, 1]} : vector<16x128xf32> to vector<2x128xf32>
    %cst_37 = arith.constant dense<0.000000e+00> : vector<2x128xf32>
    %214 = tpu.matmul %194, %6, %cst_37 {dimension_numbers = #tpu.dot_dimension_numbers<[1], [0], [0], [1], [0, 0, 1, 1], [], []>} : vector<2x32xf32>, vector<32x128xf32>, vector<2x128xf32> -> vector<2x128xf32>
    %215 = arith.addf %213, %214 : vector<2x128xf32>
    %216 = arith.negf %215 : vector<2x128xf32>
    %217 = math.exp %216 : vector<2x128xf32>
    %cst_38 = arith.constant 1.000000e+00 : f32
    %218 = vector.broadcast %cst_38 : f32 to vector<2x128xf32>
    %219 = arith.addf %218, %217 : vector<2x128xf32>
    %220 = arith.divf %218, %219 : vector<2x128xf32>
    %221 = math.tanh %215 : vector<2x128xf32>
    %222 = vector.extract_strided_slice %220 {offsets = [0, 0], sizes = [2, 32], strides = [1, 1]} : vector<2x128xf32> to vector<2x32xf32>
    %223 = vector.extract_strided_slice %220 {offsets = [0, 32], sizes = [2, 32], strides = [1, 1]} : vector<2x128xf32> to vector<2x32xf32>
    %224 = vector.extract_strided_slice %221 {offsets = [0, 64], sizes = [2, 32], strides = [1, 1]} : vector<2x128xf32> to vector<2x32xf32>
    %225 = vector.extract_strided_slice %220 {offsets = [0, 96], sizes = [2, 32], strides = [1, 1]} : vector<2x128xf32> to vector<2x32xf32>
    %226 = arith.mulf %223, %192 : vector<2x32xf32>
    %227 = arith.mulf %222, %224 : vector<2x32xf32>
    %228 = arith.addf %226, %227 : vector<2x32xf32>
    %229 = math.tanh %228 : vector<2x32xf32>
    %230 = arith.mulf %225, %229 : vector<2x32xf32>
    %231 = tpu.concatenate %194, %212 in 1 : vector<2x32xf32>, vector<2x32xf32> -> vector<2x64xf32>
    %cst_39 = arith.constant dense<0.000000e+00> : vector<2x128xf32>
    %232 = tpu.matmul %231, %7, %cst_39 {dimension_numbers = #tpu.dot_dimension_numbers<[1], [0], [0], [1], [0, 0, 1, 1], [], []>} : vector<2x64xf32>, vector<64x128xf32>, vector<2x128xf32> -> vector<2x128xf32>
    %233 = arith.addf %232, %10 : vector<2x128xf32>
    %234 = arith.negf %233 : vector<2x128xf32>
    %235 = math.exp %234 : vector<2x128xf32>
    %cst_40 = arith.constant 1.000000e+00 : f32
    %236 = vector.broadcast %cst_40 : f32 to vector<2x128xf32>
    %237 = arith.addf %236, %235 : vector<2x128xf32>
    %238 = arith.divf %236, %237 : vector<2x128xf32>
    %239 = math.tanh %233 : vector<2x128xf32>
    %240 = vector.extract_strided_slice %238 {offsets = [0, 0], sizes = [2, 32], strides = [1, 1]} : vector<2x128xf32> to vector<2x32xf32>
    %241 = vector.extract_strided_slice %238 {offsets = [0, 32], sizes = [2, 32], strides = [1, 1]} : vector<2x128xf32> to vector<2x32xf32>
    %242 = vector.extract_strided_slice %239 {offsets = [0, 64], sizes = [2, 32], strides = [1, 1]} : vector<2x128xf32> to vector<2x32xf32>
    %243 = vector.extract_strided_slice %238 {offsets = [0, 96], sizes = [2, 32], strides = [1, 1]} : vector<2x128xf32> to vector<2x32xf32>
    %244 = arith.mulf %241, %210 : vector<2x32xf32>
    %245 = arith.mulf %240, %242 : vector<2x32xf32>
    %246 = arith.addf %244, %245 : vector<2x32xf32>
    %247 = math.tanh %246 : vector<2x32xf32>
    %248 = arith.mulf %243, %247 : vector<2x32xf32>
    %249 = vector.extract_strided_slice %5 {offsets = [14, 0], sizes = [2, 128], strides = [1, 1]} : vector<16x128xf32> to vector<2x128xf32>
    %cst_41 = arith.constant dense<0.000000e+00> : vector<2x128xf32>
    %250 = tpu.matmul %230, %6, %cst_41 {dimension_numbers = #tpu.dot_dimension_numbers<[1], [0], [0], [1], [0, 0, 1, 1], [], []>} : vector<2x32xf32>, vector<32x128xf32>, vector<2x128xf32> -> vector<2x128xf32>
    %251 = arith.addf %249, %250 : vector<2x128xf32>
    %252 = arith.negf %251 : vector<2x128xf32>
    %253 = math.exp %252 : vector<2x128xf32>
    %cst_42 = arith.constant 1.000000e+00 : f32
    %254 = vector.broadcast %cst_42 : f32 to vector<2x128xf32>
    %255 = arith.addf %254, %253 : vector<2x128xf32>
    %256 = arith.divf %254, %255 : vector<2x128xf32>
    %257 = math.tanh %251 : vector<2x128xf32>
    %258 = vector.extract_strided_slice %256 {offsets = [0, 0], sizes = [2, 32], strides = [1, 1]} : vector<2x128xf32> to vector<2x32xf32>
    %259 = vector.extract_strided_slice %256 {offsets = [0, 32], sizes = [2, 32], strides = [1, 1]} : vector<2x128xf32> to vector<2x32xf32>
    %260 = vector.extract_strided_slice %257 {offsets = [0, 64], sizes = [2, 32], strides = [1, 1]} : vector<2x128xf32> to vector<2x32xf32>
    %261 = vector.extract_strided_slice %256 {offsets = [0, 96], sizes = [2, 32], strides = [1, 1]} : vector<2x128xf32> to vector<2x32xf32>
    %262 = arith.mulf %259, %228 : vector<2x32xf32>
    %263 = arith.mulf %258, %260 : vector<2x32xf32>
    %264 = arith.addf %262, %263 : vector<2x32xf32>
    %265 = math.tanh %264 : vector<2x32xf32>
    %266 = arith.mulf %261, %265 : vector<2x32xf32>
    %267 = tpu.concatenate %230, %248 in 1 : vector<2x32xf32>, vector<2x32xf32> -> vector<2x64xf32>
    %cst_43 = arith.constant dense<0.000000e+00> : vector<2x128xf32>
    %268 = tpu.matmul %267, %7, %cst_43 {dimension_numbers = #tpu.dot_dimension_numbers<[1], [0], [0], [1], [0, 0, 1, 1], [], []>} : vector<2x64xf32>, vector<64x128xf32>, vector<2x128xf32> -> vector<2x128xf32>
    %269 = arith.addf %268, %10 : vector<2x128xf32>
    %270 = arith.negf %269 : vector<2x128xf32>
    %271 = math.exp %270 : vector<2x128xf32>
    %cst_44 = arith.constant 1.000000e+00 : f32
    %272 = vector.broadcast %cst_44 : f32 to vector<2x128xf32>
    %273 = arith.addf %272, %271 : vector<2x128xf32>
    %274 = arith.divf %272, %273 : vector<2x128xf32>
    %275 = math.tanh %269 : vector<2x128xf32>
    %276 = vector.extract_strided_slice %274 {offsets = [0, 0], sizes = [2, 32], strides = [1, 1]} : vector<2x128xf32> to vector<2x32xf32>
    %277 = vector.extract_strided_slice %274 {offsets = [0, 32], sizes = [2, 32], strides = [1, 1]} : vector<2x128xf32> to vector<2x32xf32>
    %278 = vector.extract_strided_slice %275 {offsets = [0, 64], sizes = [2, 32], strides = [1, 1]} : vector<2x128xf32> to vector<2x32xf32>
    %279 = vector.extract_strided_slice %274 {offsets = [0, 96], sizes = [2, 32], strides = [1, 1]} : vector<2x128xf32> to vector<2x32xf32>
    %280 = arith.mulf %277, %246 : vector<2x32xf32>
    %281 = arith.mulf %276, %278 : vector<2x32xf32>
    %282 = arith.addf %280, %281 : vector<2x32xf32>
    %283 = math.tanh %282 : vector<2x32xf32>
    %284 = arith.mulf %279, %283 : vector<2x32xf32>
    %285 = tpu.concatenate %266, %284 in 1 : vector<2x32xf32>, vector<2x32xf32> -> vector<2x64xf32>
    %cst_45 = arith.constant dense<0.000000e+00> : vector<2x128xf32>
    %286 = tpu.matmul %285, %7, %cst_45 {dimension_numbers = #tpu.dot_dimension_numbers<[1], [0], [0], [1], [0, 0, 1, 1], [], []>} : vector<2x64xf32>, vector<64x128xf32>, vector<2x128xf32> -> vector<2x128xf32>
    %287 = arith.addf %286, %10 : vector<2x128xf32>
    %288 = arith.negf %287 : vector<2x128xf32>
    %289 = math.exp %288 : vector<2x128xf32>
    %cst_46 = arith.constant 1.000000e+00 : f32
    %290 = vector.broadcast %cst_46 : f32 to vector<2x128xf32>
    %291 = arith.addf %290, %289 : vector<2x128xf32>
    %292 = arith.divf %290, %291 : vector<2x128xf32>
    %293 = math.tanh %287 : vector<2x128xf32>
    %294 = vector.extract_strided_slice %292 {offsets = [0, 0], sizes = [2, 32], strides = [1, 1]} : vector<2x128xf32> to vector<2x32xf32>
    %295 = vector.extract_strided_slice %292 {offsets = [0, 32], sizes = [2, 32], strides = [1, 1]} : vector<2x128xf32> to vector<2x32xf32>
    %296 = vector.extract_strided_slice %293 {offsets = [0, 64], sizes = [2, 32], strides = [1, 1]} : vector<2x128xf32> to vector<2x32xf32>
    %297 = vector.extract_strided_slice %292 {offsets = [0, 96], sizes = [2, 32], strides = [1, 1]} : vector<2x128xf32> to vector<2x32xf32>
    %298 = arith.mulf %295, %282 : vector<2x32xf32>
    %299 = arith.mulf %294, %296 : vector<2x32xf32>
    %300 = arith.addf %298, %299 : vector<2x32xf32>
    %301 = math.tanh %300 : vector<2x32xf32>
    %302 = arith.mulf %297, %301 : vector<2x32xf32>
    %c0_47 = arith.constant 0 : index
    %c0_48 = arith.constant 0 : index
    %303 = vector.load %arg6[%c0_47, %c0_48] : memref<1x32xf32, #tpu.memory_space<vmem>>, vector<1x32xf32>
    %304 = vector.broadcast %303 : vector<1x32xf32> to vector<2x32xf32>
    %305 = arith.mulf %302, %304 : vector<2x32xf32>
    %cst_49 = arith.constant dense<0.000000e+00> : vector<2xf32>
    %306 = vector.multi_reduction <add>, %305, %cst_49 [1] : vector<2x32xf32> to vector<2xf32>
    %307 = vector.shape_cast %306 : vector<2xf32> to vector<2x1xf32>
    %c0_50 = arith.constant 0 : index
    %c0_51 = arith.constant 0 : index
    %308 = vector.load %arg7[%c0_50, %c0_51] : memref<1x1xf32, #tpu.memory_space<vmem>>, vector<1x1xf32>
    %309 = vector.broadcast %308 : vector<1x1xf32> to vector<2x1xf32>
    %310 = arith.addf %307, %309 : vector<2x1xf32>
    %c0_52 = arith.constant 0 : index
    %c0_53 = arith.constant 0 : index
    %311 = vector.load %arg8[%c0_52, %c0_53] : memref<2x1xf32, #tpu.memory_space<vmem>>, vector<2x1xf32>
    tpu.vector_store %arg8[%c0_52, %c0_53], %310 {strides = array<i32>} : memref<2x1xf32, #tpu.memory_space<vmem>>, vector<2x1xf32>,
    return
  }
}

</mosaic_0001>

<llo_original>
// kernel: lstm_model_pallas.1
$region0: #{lstm_model_pallas.1}
  #allocation0 [shape = 'u32[]', space=smem, size = 0x4, offset = 0x4, fixed_abs, tag = 'smem constant byte address 0x4 - core index']
  #allocation1 [shape = 'u32[144,128]{1,0:T(1,128)}', space=vmem, size = 0x12000, scoped, tag = 'internal scratch']
  #allocation2 [shape = 'f32[1,1]{1,0:T(1,128)S(1)}', space=vmem, size = 0x200, scoped, tag = 'scoped memory for lstm_model_pallas.1']
  %s0 = inlined_call_operand.vmem [shape: f32[16,4], index: 0, kind: input, shape index: {}]
  %s1 = inlined_call_operand.vmem [shape: f32[4,128], index: 1, kind: input, shape index: {}]
  %s2 = inlined_call_operand.vmem [shape: f32[32,128], index: 2, kind: input, shape index: {}]
  %s3 = inlined_call_operand.vmem [shape: f32[1,128], index: 3, kind: input, shape index: {}]
  %s4 = inlined_call_operand.vmem [shape: f32[64,128], index: 4, kind: input, shape index: {}]
  %s5 = inlined_call_operand.vmem [shape: f32[1,128], index: 5, kind: input, shape index: {}]
  %s6 = inlined_call_operand.vmem [shape: f32[1,32], index: 6, kind: input, shape index: {}]
  %s7 = inlined_call_operand.<no memory space> [shape: f32[1,1], index: 7, kind: input, shape index: {}]
  %s8 = inlined_call_operand.vmem [shape: f32[2,1], index: 8, kind: output, shape index: {}]
  %s9 = sld [smem:[#allocation0]]
  $region42: #{lstm_model_pallas.1} parent=0
    _
  %s11 = ssub.s32 1, %s9
  %s12 = scalar_select 0, %s11, %s9
  %v13 = vstv %s7
  %14 = vst [vmem:[#allocation2] sm:$0x1] %v13
  // Predicated region
  $region2: #{lstm_model_pallas.1} parent=0 // pred_check
    _
  $region3: #{lstm_model_pallas.1} parent=0 // pred_check_branch
    %16 = sbr.rel (0) target = $region5
  $region4: #{lstm_model_pallas.1} parent=0 // pred_region
    _
  $region5: #{lstm_model_pallas.1} parent=0 // pred_fallthru
    _
  // Predicated region
  $region6: #{lstm_model_pallas.1} parent=0 // pred_check
    _
  $region7: #{lstm_model_pallas.1} parent=0 // pred_check_branch
    %18 = sbr.rel (0) target = $region9
  $region8: #{lstm_model_pallas.1} parent=0 // pred_region
    _
  $region9: #{lstm_model_pallas.1} parent=0 // pred_fallthru
    _
  // Predicated region
  $region10: #{lstm_model_pallas.1} parent=0 // pred_check
    _
  $region11: #{lstm_model_pallas.1} parent=0 // pred_check_branch
    %20 = sbr.rel (0) target = $region13
  $region12: #{lstm_model_pallas.1} parent=0 // pred_region
    _
  $region13: #{lstm_model_pallas.1} parent=0 // pred_fallthru
    _
  // Predicated region
  $region14: #{lstm_model_pallas.1} parent=0 // pred_check
    _
  $region15: #{lstm_model_pallas.1} parent=0 // pred_check_branch
    %22 = sbr.rel (0) target = $region17
  $region16: #{lstm_model_pallas.1} parent=0 // pred_region
    _
  $region17: #{lstm_model_pallas.1} parent=0 // pred_fallthru
    _
  // Predicated region
  $region18: #{lstm_model_pallas.1} parent=0 // pred_check
    _
  $region19: #{lstm_model_pallas.1} parent=0 // pred_check_branch
    %24 = sbr.rel (0) target = $region21
  $region20: #{lstm_model_pallas.1} parent=0 // pred_region
    _
  $region21: #{lstm_model_pallas.1} parent=0 // pred_fallthru
    _
  // Predicated region
  $region22: #{lstm_model_pallas.1} parent=0 // pred_check
    _
  $region23: #{lstm_model_pallas.1} parent=0 // pred_check_branch
    %26 = sbr.rel (0) target = $region25
  $region24: #{lstm_model_pallas.1} parent=0 // pred_region
    _
  $region25: #{lstm_model_pallas.1} parent=0 // pred_fallthru
    _
  // Predicated region
  $region26: #{lstm_model_pallas.1} parent=0 // pred_check
    _
  $region27: #{lstm_model_pallas.1} parent=0 // pred_check_branch
    %28 = sbr.rel (0) target = $region29
  $region28: #{lstm_model_pallas.1} parent=0 // pred_region
    _
  $region29: #{lstm_model_pallas.1} parent=0 // pred_fallthru
    _
  // Predicated region
  $region30: #{lstm_model_pallas.1} parent=0 // pred_check
    _
  $region31: #{lstm_model_pallas.1} parent=0 // pred_check_branch
    %30 = sbr.rel (0) target = $region33
  $region32: #{lstm_model_pallas.1} parent=0 // pred_region
    _
  $region33: #{lstm_model_pallas.1} parent=0 // pred_fallthru
    _
  %v31 = vld [vmem:[%s0] sm:$0xff]
  %v32 = vld [vmem:[%s0 + $0x8] sm:$0xff]
  %v33 = vld [vmem:[%s1] sm:$0xf]
  %v34 = vld [vmem:[%s3] sm:$0x1]
  %v36 = vlaneseq
  %v37 = vshrl.u32 %v36, 7
  %v38 = vsub.s32 0, %v37
  %v39 = vrot.slane %v34, %v38
  %vm41 = vcmask 31744
  %v43 = vsel %vm41, %v31, 0
  %v46 = vsel %vm41, %v32, 0
  %vm48 = vcmask 1043456
  %v50 = vsel %vm48, %v33, 0
  %52 = vmatprep.subr.mxu0 0.0
  %53 = vmatpush1.msra.mxu0 0.0
  %54 = vmatprep.subr.mxu0 0.0
  %55 = vmatpush1.msra.mxu0 0.0
  %56 = vmatprep.subr.mxu0 0.0
  %57 = vmatpush1.msra.mxu0 0.0
  %58 = vmatprep.subr.mxu0 0.0
  %59 = vmatpush1.msra.mxu0 0.0
  %60 = vmatprep.subr.mxu0 0.0
  %61 = vmatpush1.msra.mxu0 0.0
  %62 = vmatprep.subr.mxu0 0.0
  %63 = vmatpush1.msra.mxu0 0.0
  %64 = vmatprep.subr.mxu0 0.0
  %65 = vmatpush1.msra.mxu0 0.0
  %66 = vmatprep.subr.mxu0 0.0
  %67 = vmatpush1.msra.mxu0 0.0
  %68 = vmatprep.subr.mxu0 0.0
  %69 = vmatpush1.msra.mxu0 0.0
  %70 = vmatprep.subr.mxu0 0.0
  %71 = vmatpush1.msra.mxu0 0.0
  %72 = vmatprep.subr.mxu0 0.0
  %73 = vmatpush1.msra.mxu0 0.0
  %74 = vmatprep.subr.mxu0 0.0
  %75 = vmatpush1.msra.mxu0 0.0
  %76 = vmatprep.subr.mxu0 0.0
  %77 = vmatpush1.msra.mxu0 0.0
  %78 = vmatprep.subr.mxu0 0.0
  %79 = vmatpush1.msra.mxu0 0.0
  %80 = vmatprep.subr.mxu0 0.0
  %81 = vmatpush1.msra.mxu0 0.0
  %82 = vmatprep.subr.mxu0 0.0
  %83 = vmatpush1.msra.mxu0 %v50
  %84 = vmatprep.subr.mxu0 0.0
  %85 = vmatpush2.msra.mxu0 0.0
  %86 = vmatprep.subr.mxu0 0.0
  %87 = vmatpush2.msra.mxu0 0.0
  %88 = vmatprep.subr.mxu0 0.0
  %89 = vmatpush2.msra.mxu0 0.0
  %90 = vmatprep.subr.mxu0 0.0
  %91 = vmatpush2.msra.mxu0 0.0
  %92 = vmatprep.subr.mxu0 0.0
  %93 = vmatpush2.msra.mxu0 0.0
  %94 = vmatprep.subr.mxu0 0.0
  %95 = vmatpush2.msra.mxu0 0.0
  %96 = vmatprep.subr.mxu0 0.0
  %97 = vmatpush2.msra.mxu0 0.0
  %98 = vmatprep.subr.mxu0 0.0
  %99 = vmatpush2.msra.mxu0 0.0
  %100 = vmatprep.subr.mxu0 0.0
  %101 = vmatpush2.msra.mxu0 0.0
  %102 = vmatprep.subr.mxu0 0.0
  %103 = vmatpush2.msra.mxu0 0.0
  %104 = vmatprep.subr.mxu0 0.0
  %105 = vmatpush2.msra.mxu0 0.0
  %106 = vmatprep.subr.mxu0 0.0
  %107 = vmatpush2.msra.mxu0 0.0
  %108 = vmatprep.subr.mxu0 0.0
  %109 = vmatpush2.msra.mxu0 0.0
  %110 = vmatprep.subr.mxu0 0.0
  %111 = vmatpush2.msra.mxu0 0.0
  %112 = vmatprep.subr.mxu0 0.0
  %113 = vmatpush2.msra.mxu0 0.0
  %114 = vmatprep.subr.mxu0 0.0
  %115 = vmatpush2.msra.mxu0 0.0
  %116 = vmatprep.mubr.f32.mxu0 0.0
  %117 = vmatmul.mubr.f32.gmra.mxu0 %v43
  %v118 = vpop.f32.mrf.mxu0
  %v119 = vadd.f32 %v39, %v118
  %v120 = vpop.f32.mrf.mxu0
  %121 = vmatprep.mubr.f32.mxu0 0.0
  %122 = vmatmul.mubr.f32.gmra.mxu0 %v46
  %v123 = vpop.f32.mrf.mxu0
  %v124 = vadd.f32 %v39, %v123
  %v125 = vpop.f32.mrf.mxu0
  %126 = vdwg.mxu0
  %v127 = vld [vmem:[%s2] sm:$0xff]
  %v128 = vld [vmem:[%s2 + $0x8] sm:$0xff]
  %v129 = vld [vmem:[%s2 + $0x10] sm:$0xff]
  %v130 = vld [vmem:[%s2 + $0x18] sm:$0xff]
  %v131 = vld [vmem:[%s4] sm:$0xff]
  %v132 = vld [vmem:[%s4 + $0x8] sm:$0xff]
  %v133 = vld [vmem:[%s4 + $0x10] sm:$0xff]
  %v134 = vld [vmem:[%s4 + $0x18] sm:$0xff]
  %v135 = vld [vmem:[%s4 + $0x20] sm:$0xff]
  %v136 = vld [vmem:[%s4 + $0x28] sm:$0xff]
  %v137 = vld [vmem:[%s4 + $0x30] sm:$0xff]
  %v138 = vld [vmem:[%s4 + $0x38] sm:$0xff]
  %v139 = vld [vmem:[%s5] sm:$0x1]
  %v141 = vlaneseq
  %v142 = vshrl.u32 %v141, 7
  %v143 = vsub.s32 0, %v142
  %v144 = vrot.slane %v139, %v143
  %vm146 = vcmask 261120
  %v148 = vsel %vm146, 0.0, 0
  %150 = vmatprep.subr.mxu0 0.0
  %151 = vmatpush1.msra.mxu0 0.0
  %152 = vmatprep.subr.mxu0 0.0
  %153 = vmatpush1.msra.mxu0 0.0
  %154 = vmatprep.subr.mxu0 0.0
  %155 = vmatpush1.msra.mxu0 0.0
  %156 = vmatprep.subr.mxu0 0.0
  %157 = vmatpush1.msra.mxu0 0.0
  %158 = vmatprep.subr.mxu0 0.0
  %159 = vmatpush1.msra.mxu0 0.0
  %160 = vmatprep.subr.mxu0 0.0
  %161 = vmatpush1.msra.mxu0 0.0
  %162 = vmatprep.subr.mxu0 0.0
  %163 = vmatpush1.msra.mxu0 0.0
  %164 = vmatprep.subr.mxu0 0.0
  %165 = vmatpush1.msra.mxu0 0.0
  %166 = vmatprep.subr.mxu0 0.0
  %167 = vmatpush1.msra.mxu0 0.0
  %168 = vmatprep.subr.mxu0 0.0
  %169 = vmatpush1.msra.mxu0 0.0
  %170 = vmatprep.subr.mxu0 0.0
  %171 = vmatpush1.msra.mxu0 0.0
  %172 = vmatprep.subr.mxu0 0.0
  %173 = vmatpush1.msra.mxu0 0.0
  %174 = vmatprep.subr.mxu0 0.0
  %175 = vmatpush1.msra.mxu0 %v130
  %176 = vmatprep.subr.mxu0 0.0
  %177 = vmatpush1.msra.mxu0 %v129
  %178 = vmatprep.subr.mxu0 0.0
  %179 = vmatpush1.msra.mxu0 %v128
  %180 = vmatprep.subr.mxu0 0.0
  %181 = vmatpush1.msra.mxu0 %v127
  %182 = vmatprep.subr.mxu0 0.0
  %183 = vmatpush2.msra.mxu0 0.0
  %184 = vmatprep.subr.mxu0 0.0
  %185 = vmatpush2.msra.mxu0 0.0
  %186 = vmatprep.subr.mxu0 0.0
  %187 = vmatpush2.msra.mxu0 0.0
  %188 = vmatprep.subr.mxu0 0.0
  %189 = vmatpush2.msra.mxu0 0.0
  %190 = vmatprep.subr.mxu0 0.0
  %191 = vmatpush2.msra.mxu0 0.0
  %192 = vmatprep.subr.mxu0 0.0
  %193 = vmatpush2.msra.mxu0 0.0
  %194 = vmatprep.subr.mxu0 0.0
  %195 = vmatpush2.msra.mxu0 0.0
  %196 = vmatprep.subr.mxu0 0.0
  %197 = vmatpush2.msra.mxu0 0.0
  %198 = vmatprep.subr.mxu0 0.0
  %199 = vmatpush2.msra.mxu0 0.0
  %200 = vmatprep.subr.mxu0 0.0
  %201 = vmatpush2.msra.mxu0 0.0
  %202 = vmatprep.subr.mxu0 0.0
  %203 = vmatpush2.msra.mxu0 0.0
  %204 = vmatprep.subr.mxu0 0.0
  %205 = vmatpush2.msra.mxu0 0.0
  %206 = vmatprep.subr.mxu0 0.0
  %207 = vmatpush2.msra.mxu0 0.0
  %208 = vmatprep.subr.mxu0 0.0
  %209 = vmatpush2.msra.mxu0 0.0
  %210 = vmatprep.subr.mxu0 0.0
  %211 = vmatpush2.msra.mxu0 0.0
  %212 = vmatprep.subr.mxu0 0.0
  %213 = vmatpush2.msra.mxu0 0.0
  %214 = vmatprep.mubr.f32.mxu0 0.0
  %215 = vmatmul.mubr.f32.gmra.mxu0 %v148
  %v216 = vpop.f32.mrf.mxu0
  %v217 = vadd.f32 0.0, %v216
  %v218 = vpop.f32.mrf.mxu0
  %219 = vdwg.mxu0
  %v220 = vadd.f32 %v119, %v217
  %v221 = vxor.u32 %v220, 2147483648
  %v222 = vmul.f32 %v221, 1.442695
  %v223 = vpow.pop %v222
  %v224 = vadd.f32 %v223, 1.0
  %v225 = vrcp.pop %v224
  %v226 = vmul.f32 1.0, %v225
  %v227 = vtanh.pop %v220
  %v228 = vmul.f32 %v226, 0.0
  %230 = vrot.lane.b32.xlu0 %v227, 64
  %v231 = vpop.permute.xlu0 %230
  %v233 = vmul.f32 %v226, %v231
  %235 = vrot.lane.b32.xlu0 %v233, 32
  %v236 = vpop.permute.xlu0 %235
  %v238 = vadd.f32 %v228, %v236
  %v239 = vtanh.pop %v238
  %241 = vrot.lane.b32.xlu0 %v239, 64
  %v242 = vpop.permute.xlu0 %241
  %v244 = vmul.f32 %v226, %v242
  %246 = vrot.lane.b32.xlu0 %v244, 32
  %v247 = vpop.permute.xlu0 %246
  %v248 = vsel %vm146, %v247, 0
  %250 = vmatprep.subr.mxu0 0.0
  %251 = vmatpush1.msra.mxu0 0.0
  %252 = vmatprep.subr.mxu0 0.0
  %253 = vmatpush1.msra.mxu0 0.0
  %254 = vmatprep.subr.mxu0 0.0
  %255 = vmatpush1.msra.mxu0 0.0
  %256 = vmatprep.subr.mxu0 0.0
  %257 = vmatpush1.msra.mxu0 0.0
  %258 = vmatprep.subr.mxu0 0.0
  %259 = vmatpush1.msra.mxu0 0.0
  %260 = vmatprep.subr.mxu0 0.0
  %261 = vmatpush1.msra.mxu0 0.0
  %262 = vmatprep.subr.mxu0 0.0
  %263 = vmatpush1.msra.mxu0 0.0
  %264 = vmatprep.subr.mxu0 0.0
  %265 = vmatpush1.msra.mxu0 0.0
  %266 = vmatprep.subr.mxu0 0.0
  %267 = vmatpush1.msra.mxu0 0.0
  %268 = vmatprep.subr.mxu0 0.0
  %269 = vmatpush1.msra.mxu0 0.0
  %270 = vmatprep.subr.mxu0 0.0
  %271 = vmatpush1.msra.mxu0 0.0
  %272 = vmatprep.subr.mxu0 0.0
  %273 = vmatpush1.msra.mxu0 0.0
  %274 = vmatprep.subr.mxu0 0.0
  %275 = vmatpush1.msra.mxu0 %v130
  %276 = vmatprep.subr.mxu0 0.0
  %277 = vmatpush1.msra.mxu0 %v129
  %278 = vmatprep.subr.mxu0 0.0
  %279 = vmatpush1.msra.mxu0 %v128
  %280 = vmatprep.subr.mxu0 0.0
  %281 = vmatpush1.msra.mxu0 %v127
  %282 = vmatprep.subr.mxu0 0.0
  %283 = vmatpush2.msra.mxu0 0.0
  %284 = vmatprep.subr.mxu0 0.0
  %285 = vmatpush2.msra.mxu0 0.0
  %286 = vmatprep.subr.mxu0 0.0
  %287 = vmatpush2.msra.mxu0 0.0
  %288 = vmatprep.subr.mxu0 0.0
  %289 = vmatpush2.msra.mxu0 0.0
  %290 = vmatprep.subr.mxu0 0.0
  %291 = vmatpush2.msra.mxu0 0.0
  %292 = vmatprep.subr.mxu0 0.0
  %293 = vmatpush2.msra.mxu0 0.0
  %294 = vmatprep.subr.mxu0 0.0
  %295 = vmatpush2.msra.mxu0 0.0
  %296 = vmatprep.subr.mxu0 0.0
  %297 = vmatpush2.msra.mxu0 0.0
  %298 = vmatprep.subr.mxu0 0.0
  %299 = vmatpush2.msra.mxu0 0.0
  %300 = vmatprep.subr.mxu0 0.0
  %301 = vmatpush2.msra.mxu0 0.0
  %302 = vmatprep.subr.mxu0 0.0
  %303 = vmatpush2.msra.mxu0 0.0
  %304 = vmatprep.subr.mxu0 0.0
  %305 = vmatpush2.msra.mxu0 0.0
  %306 = vmatprep.subr.mxu0 0.0
  %307 = vmatpush2.msra.mxu0 0.0
  %308 = vmatprep.subr.mxu0 0.0
  %309 = vmatpush2.msra.mxu0 0.0
  %310 = vmatprep.subr.mxu0 0.0
  %311 = vmatpush2.msra.mxu0 0.0
  %312 = vmatprep.subr.mxu0 0.0
  %313 = vmatpush2.msra.mxu0 0.0
  %314 = vmatprep.mubr.f32.mxu0 0.0
  %315 = vmatmul.mubr.f32.gmra.mxu0 %v248
  %v316 = vpop.f32.mrf.mxu0
  %v317 = vadd.f32 0.0, %v316
  %v318 = vpop.f32.mrf.mxu0
  %319 = vdwg.mxu0
  %v321 = vrot.slane %v317, 6
  %v323 = vadd.f32 %v119, %v321
  %v324 = vxor.u32 %v323, 2147483648
  %v325 = vmul.f32 %v324, 1.442695
  %v326 = vpow.pop %v325
  %v327 = vadd.f32 %v326, 1.0
  %v328 = vrcp.pop %v327
  %v329 = vmul.f32 1.0, %v328
  %v330 = vtanh.pop %v323
  %v332 = vrot.slane %v238, 6
  %v334 = vmul.f32 %v329, %v332
  %336 = vrot.lane.b32.xlu0 %v330, 64
  %v337 = vpop.permute.xlu0 %336
  %v339 = vmul.f32 %v329, %v337
  %341 = vrot.lane.b32.xlu0 %v339, 32
  %v342 = vpop.permute.xlu0 %341
  %v344 = vadd.f32 %v334, %v342
  %v345 = vtanh.pop %v344
  %347 = vrot.lane.b32.xlu0 %v345, 64
  %v348 = vpop.permute.xlu0 %347
  %v350 = vmul.f32 %v329, %v348
  %v352 = vsel %vm146, %v247, 0.0
  %vm353 = vcmask 523264
  %v355 = vsel %vm353, %v352, 0
  %357 = vmatprep.subr.mxu0 0.0
  %358 = vmatpush1.msra.mxu0 0.0
  %359 = vmatprep.subr.mxu0 0.0
  %360 = vmatpush1.msra.mxu0 0.0
  %361 = vmatprep.subr.mxu0 0.0
  %362 = vmatpush1.msra.mxu0 0.0
  %363 = vmatprep.subr.mxu0 0.0
  %364 = vmatpush1.msra.mxu0 0.0
  %365 = vmatprep.subr.mxu0 0.0
  %366 = vmatpush1.msra.mxu0 0.0
  %367 = vmatprep.subr.mxu0 0.0
  %368 = vmatpush1.msra.mxu0 0.0
  %369 = vmatprep.subr.mxu0 0.0
  %370 = vmatpush1.msra.mxu0 0.0
  %371 = vmatprep.subr.mxu0 0.0
  %372 = vmatpush1.msra.mxu0 0.0
  %373 = vmatprep.subr.mxu0 0.0
  %374 = vmatpush1.msra.mxu0 %v138
  %375 = vmatprep.subr.mxu0 0.0
  %376 = vmatpush1.msra.mxu0 %v137
  %377 = vmatprep.subr.mxu0 0.0
  %378 = vmatpush1.msra.mxu0 %v136
  %379 = vmatprep.subr.mxu0 0.0
  %380 = vmatpush1.msra.mxu0 %v135
  %381 = vmatprep.subr.mxu0 0.0
  %382 = vmatpush1.msra.mxu0 %v134
  %383 = vmatprep.subr.mxu0 0.0
  %384 = vmatpush1.msra.mxu0 %v133
  %385 = vmatprep.subr.mxu0 0.0
  %386 = vmatpush1.msra.mxu0 %v132
  %387 = vmatprep.subr.mxu0 0.0
  %388 = vmatpush1.msra.mxu0 %v131
  %389 = vmatprep.subr.mxu0 0.0
  %390 = vmatpush2.msra.mxu0 0.0
  %391 = vmatprep.subr.mxu0 0.0
  %392 = vmatpush2.msra.mxu0 0.0
  %393 = vmatprep.subr.mxu0 0.0
  %394 = vmatpush2.msra.mxu0 0.0
  %395 = vmatprep.subr.mxu0 0.0
  %396 = vmatpush2.msra.mxu0 0.0
  %397 = vmatprep.subr.mxu0 0.0
  %398 = vmatpush2.msra.mxu0 0.0
  %399 = vmatprep.subr.mxu0 0.0
  %400 = vmatpush2.msra.mxu0 0.0
  %401 = vmatprep.subr.mxu0 0.0
  %402 = vmatpush2.msra.mxu0 0.0
  %403 = vmatprep.subr.mxu0 0.0
  %404 = vmatpush2.msra.mxu0 0.0
  %405 = vmatprep.subr.mxu0 0.0
  %406 = vmatpush2.msra.mxu0 0.0
  %407 = vmatprep.subr.mxu0 0.0
  %408 = vmatpush2.msra.mxu0 0.0
  %409 = vmatprep.subr.mxu0 0.0
  %410 = vmatpush2.msra.mxu0 0.0
  %411 = vmatprep.subr.mxu0 0.0
  %412 = vmatpush2.msra.mxu0 0.0
  %413 = vmatprep.subr.mxu0 0.0
  %414 = vmatpush2.msra.mxu0 0.0
  %415 = vmatprep.subr.mxu0 0.0
  %416 = vmatpush2.msra.mxu0 0.0
  %417 = vmatprep.subr.mxu0 0.0
  %418 = vmatpush2.msra.mxu0 0.0
  %419 = vmatprep.subr.mxu0 0.0
  %420 = vmatpush2.msra.mxu0 0.0
  %421 = vmatprep.mubr.f32.mxu0 0.0
  %422 = vmatmul.mubr.f32.gmra.mxu0 %v355
  %v423 = vpop.f32.mrf.mxu0
  %v424 = vadd.f32 %v144, %v423
  %v425 = vpop.f32.mrf.mxu0
  %426 = vdwg.mxu0
  %v427 = vxor.u32 %v424, 2147483648
  %v428 = vmul.f32 %v427, 1.442695
  %v429 = vpow.pop %v428
  %v430 = vadd.f32 %v429, 1.0
  %v431 = vrcp.pop %v430
  %v432 = vmul.f32 1.0, %v431
  %v433 = vtanh.pop %v424
  %v434 = vmul.f32 %v432, 0.0
  %436 = vrot.lane.b32.xlu0 %v433, 64
  %v437 = vpop.permute.xlu0 %436
  %v439 = vmul.f32 %v432, %v437
  %441 = vrot.lane.b32.xlu0 %v439, 32
  %v442 = vpop.permute.xlu0 %441
  %v444 = vadd.f32 %v434, %v442
  %v445 = vtanh.pop %v444
  %447 = vrot.lane.b32.xlu0 %v445, 64
  %v448 = vpop.permute.xlu0 %447
  %v450 = vmul.f32 %v432, %v448
  %v452 = vrot.slane %v350, 2
  %453 = vrot.lane.b32.xlu0 %v452, 32
  %v454 = vpop.permute.xlu0 %453
  %v455 = vsel %vm146, %v454, 0
  %457 = vmatprep.subr.mxu0 0.0
  %458 = vmatpush1.msra.mxu0 0.0
  %459 = vmatprep.subr.mxu0 0.0
  %460 = vmatpush1.msra.mxu0 0.0
  %461 = vmatprep.subr.mxu0 0.0
  %462 = vmatpush1.msra.mxu0 0.0
  %463 = vmatprep.subr.mxu0 0.0
  %464 = vmatpush1.msra.mxu0 0.0
  %465 = vmatprep.subr.mxu0 0.0
  %466 = vmatpush1.msra.mxu0 0.0
  %467 = vmatprep.subr.mxu0 0.0
  %468 = vmatpush1.msra.mxu0 0.0
  %469 = vmatprep.subr.mxu0 0.0
  %470 = vmatpush1.msra.mxu0 0.0
  %471 = vmatprep.subr.mxu0 0.0
  %472 = vmatpush1.msra.mxu0 0.0
  %473 = vmatprep.subr.mxu0 0.0
  %474 = vmatpush1.msra.mxu0 0.0
  %475 = vmatprep.subr.mxu0 0.0
  %476 = vmatpush1.msra.mxu0 0.0
  %477 = vmatprep.subr.mxu0 0.0
  %478 = vmatpush1.msra.mxu0 0.0
  %479 = vmatprep.subr.mxu0 0.0
  %480 = vmatpush1.msra.mxu0 0.0
  %481 = vmatprep.subr.mxu0 0.0
  %482 = vmatpush1.msra.mxu0 %v130
  %483 = vmatprep.subr.mxu0 0.0
  %484 = vmatpush1.msra.mxu0 %v129
  %485 = vmatprep.subr.mxu0 0.0
  %486 = vmatpush1.msra.mxu0 %v128
  %487 = vmatprep.subr.mxu0 0.0
  %488 = vmatpush1.msra.mxu0 %v127
  %489 = vmatprep.subr.mxu0 0.0
  %490 = vmatpush2.msra.mxu0 0.0
  %491 = vmatprep.subr.mxu0 0.0
  %492 = vmatpush2.msra.mxu0 0.0
  %493 = vmatprep.subr.mxu0 0.0
  %494 = vmatpush2.msra.mxu0 0.0
  %495 = vmatprep.subr.mxu0 0.0
  %496 = vmatpush2.msra.mxu0 0.0
  %497 = vmatprep.subr.mxu0 0.0
  %498 = vmatpush2.msra.mxu0 0.0
  %499 = vmatprep.subr.mxu0 0.0
  %500 = vmatpush2.msra.mxu0 0.0
  %501 = vmatprep.subr.mxu0 0.0
  %502 = vmatpush2.msra.mxu0 0.0
  %503 = vmatprep.subr.mxu0 0.0
  %504 = vmatpush2.msra.mxu0 0.0
  %505 = vmatprep.subr.mxu0 0.0
  %506 = vmatpush2.msra.mxu0 0.0
  %507 = vmatprep.subr.mxu0 0.0
  %508 = vmatpush2.msra.mxu0 0.0
  %509 = vmatprep.subr.mxu0 0.0
  %510 = vmatpush2.msra.mxu0 0.0
  %511 = vmatprep.subr.mxu0 0.0
  %512 = vmatpush2.msra.mxu0 0.0
  %513 = vmatprep.subr.mxu0 0.0
  %514 = vmatpush2.msra.mxu0 0.0
  %515 = vmatprep.subr.mxu0 0.0
  %516 = vmatpush2.msra.mxu0 0.0
  %517 = vmatprep.subr.mxu0 0.0
  %518 = vmatpush2.msra.mxu0 0.0
  %519 = vmatprep.subr.mxu0 0.0
  %520 = vmatpush2.msra.mxu0 0.0
  %521 = vmatprep.mubr.f32.mxu0 0.0
  %522 = vmatmul.mubr.f32.gmra.mxu0 %v455
  %v523 = vpop.f32.mrf.mxu0
  %v524 = vadd.f32 0.0, %v523
  %v525 = vpop.f32.mrf.mxu0
  %526 = vdwg.mxu0
  %v528 = vrot.slane %v524, 4
  %v530 = vadd.f32 %v119, %v528
  %v531 = vxor.u32 %v530, 2147483648
  %v532 = vmul.f32 %v531, 1.442695
  %v533 = vpow.pop %v532
  %v534 = vadd.f32 %v533, 1.0
  %v535 = vrcp.pop %v534
  %v536 = vmul.f32 1.0, %v535
  %v537 = vtanh.pop %v530
  %v539 = vrot.slane %v344, 6
  %v541 = vmul.f32 %v536, %v539
  %543 = vrot.lane.b32.xlu0 %v537, 64
  %v544 = vpop.permute.xlu0 %543
  %v546 = vmul.f32 %v536, %v544
  %548 = vrot.lane.b32.xlu0 %v546, 32
  %v549 = vpop.permute.xlu0 %548
  %v551 = vadd.f32 %v541, %v549
  %v552 = vtanh.pop %v551
  %554 = vrot.lane.b32.xlu0 %v552, 64
  %v555 = vpop.permute.xlu0 %554
  %v557 = vmul.f32 %v536, %v555
  %558 = vrot.lane.b32.xlu0 %v350, 32
  %v559 = vpop.permute.xlu0 %558
  %v562 = vrot.slane %v450, 6
  %563 = vrot.lane.b32.xlu0 %v562, 64
  %v564 = vpop.permute.xlu0 %563
  %v566 = vsel %vm146, %v559, %v564
  %v568 = vrot.slane %v566, 2
  %v569 = vsel %vm353, %v568, 0
  %571 = vmatprep.subr.mxu0 0.0
  %572 = vmatpush1.msra.mxu0 0.0
  %573 = vmatprep.subr.mxu0 0.0
  %574 = vmatpush1.msra.mxu0 0.0
  %575 = vmatprep.subr.mxu0 0.0
  %576 = vmatpush1.msra.mxu0 0.0
  %577 = vmatprep.subr.mxu0 0.0
  %578 = vmatpush1.msra.mxu0 0.0
  %579 = vmatprep.subr.mxu0 0.0
  %580 = vmatpush1.msra.mxu0 0.0
  %581 = vmatprep.subr.mxu0 0.0
  %582 = vmatpush1.msra.mxu0 0.0
  %583 = vmatprep.subr.mxu0 0.0
  %584 = vmatpush1.msra.mxu0 0.0
  %585 = vmatprep.subr.mxu0 0.0
  %586 = vmatpush1.msra.mxu0 0.0
  %587 = vmatprep.subr.mxu0 0.0
  %588 = vmatpush1.msra.mxu0 %v138
  %589 = vmatprep.subr.mxu0 0.0
  %590 = vmatpush1.msra.mxu0 %v137
  %591 = vmatprep.subr.mxu0 0.0
  %592 = vmatpush1.msra.mxu0 %v136
  %593 = vmatprep.subr.mxu0 0.0
  %594 = vmatpush1.msra.mxu0 %v135
  %595 = vmatprep.subr.mxu0 0.0
  %596 = vmatpush1.msra.mxu0 %v134
  %597 = vmatprep.subr.mxu0 0.0
  %598 = vmatpush1.msra.mxu0 %v133
  %599 = vmatprep.subr.mxu0 0.0
  %600 = vmatpush1.msra.mxu0 %v132
  %601 = vmatprep.subr.mxu0 0.0
  %602 = vmatpush1.msra.mxu0 %v131
  %603 = vmatprep.subr.mxu0 0.0
  %604 = vmatpush2.msra.mxu0 0.0
  %605 = vmatprep.subr.mxu0 0.0
  %606 = vmatpush2.msra.mxu0 0.0
  %607 = vmatprep.subr.mxu0 0.0
  %608 = vmatpush2.msra.mxu0 0.0
  %609 = vmatprep.subr.mxu0 0.0
  %610 = vmatpush2.msra.mxu0 0.0
  %611 = vmatprep.subr.mxu0 0.0
  %612 = vmatpush2.msra.mxu0 0.0
  %613 = vmatprep.subr.mxu0 0.0
  %614 = vmatpush2.msra.mxu0 0.0
  %615 = vmatprep.subr.mxu0 0.0
  %616 = vmatpush2.msra.mxu0 0.0
  %617 = vmatprep.subr.mxu0 0.0
  %618 = vmatpush2.msra.mxu0 0.0
  %619 = vmatprep.subr.mxu0 0.0
  %620 = vmatpush2.msra.mxu0 0.0
  %621 = vmatprep.subr.mxu0 0.0
  %622 = vmatpush2.msra.mxu0 0.0
  %623 = vmatprep.subr.mxu0 0.0
  %624 = vmatpush2.msra.mxu0 0.0
  %625 = vmatprep.subr.mxu0 0.0
  %626 = vmatpush2.msra.mxu0 0.0
  %627 = vmatprep.subr.mxu0 0.0
  %628 = vmatpush2.msra.mxu0 0.0
  %629 = vmatprep.subr.mxu0 0.0
  %630 = vmatpush2.msra.mxu0 0.0
  %631 = vmatprep.subr.mxu0 0.0
  %632 = vmatpush2.msra.mxu0 0.0
  %633 = vmatprep.subr.mxu0 0.0
  %634 = vmatpush2.msra.mxu0 0.0
  %635 = vmatprep.mubr.f32.mxu0 0.0
  %636 = vmatmul.mubr.f32.gmra.mxu0 %v569
  %v637 = vpop.f32.mrf.mxu0
  %v638 = vadd.f32 %v144, %v637
  %v639 = vpop.f32.mrf.mxu0
  %640 = vdwg.mxu0
  %v641 = vxor.u32 %v638, 2147483648
  %v642 = vmul.f32 %v641, 1.442695
  %v643 = vpow.pop %v642
  %v644 = vadd.f32 %v643, 1.0
  %v645 = vrcp.pop %v644
  %v646 = vmul.f32 1.0, %v645
  %v647 = vtanh.pop %v638
  %v648 = vmul.f32 %v646, %v444
  %650 = vrot.lane.b32.xlu0 %v647, 64
  %v651 = vpop.permute.xlu0 %650
  %v653 = vmul.f32 %v646, %v651
  %655 = vrot.lane.b32.xlu0 %v653, 32
  %v656 = vpop.permute.xlu0 %655
  %v658 = vadd.f32 %v648, %v656
  %v659 = vtanh.pop %v658
  %661 = vrot.lane.b32.xlu0 %v659, 64
  %v662 = vpop.permute.xlu0 %661
  %v664 = vmul.f32 %v646, %v662
  %v666 = vrot.slane %v557, 4
  %667 = vrot.lane.b32.xlu0 %v666, 32
  %v668 = vpop.permute.xlu0 %667
  %v669 = vsel %vm146, %v668, 0
  %671 = vmatprep.subr.mxu0 0.0
  %672 = vmatpush1.msra.mxu0 0.0
  %673 = vmatprep.subr.mxu0 0.0
  %674 = vmatpush1.msra.mxu0 0.0
  %675 = vmatprep.subr.mxu0 0.0
  %676 = vmatpush1.msra.mxu0 0.0
  %677 = vmatprep.subr.mxu0 0.0
  %678 = vmatpush1.msra.mxu0 0.0
  %679 = vmatprep.subr.mxu0 0.0
  %680 = vmatpush1.msra.mxu0 0.0
  %681 = vmatprep.subr.mxu0 0.0
  %682 = vmatpush1.msra.mxu0 0.0
  %683 = vmatprep.subr.mxu0 0.0
  %684 = vmatpush1.msra.mxu0 0.0
  %685 = vmatprep.subr.mxu0 0.0
  %686 = vmatpush1.msra.mxu0 0.0
  %687 = vmatprep.subr.mxu0 0.0
  %688 = vmatpush1.msra.mxu0 0.0
  %689 = vmatprep.subr.mxu0 0.0
  %690 = vmatpush1.msra.mxu0 0.0
  %691 = vmatprep.subr.mxu0 0.0
  %692 = vmatpush1.msra.mxu0 0.0
  %693 = vmatprep.subr.mxu0 0.0
  %694 = vmatpush1.msra.mxu0 0.0
  %695 = vmatprep.subr.mxu0 0.0
  %696 = vmatpush1.msra.mxu0 %v130
  %697 = vmatprep.subr.mxu0 0.0
  %698 = vmatpush1.msra.mxu0 %v129
  %699 = vmatprep.subr.mxu0 0.0
  %700 = vmatpush1.msra.mxu0 %v128
  %701 = vmatprep.subr.mxu0 0.0
  %702 = vmatpush1.msra.mxu0 %v127
  %703 = vmatprep.subr.mxu0 0.0
  %704 = vmatpush2.msra.mxu0 0.0
  %705 = vmatprep.subr.mxu0 0.0
  %706 = vmatpush2.msra.mxu0 0.0
  %707 = vmatprep.subr.mxu0 0.0
  %708 = vmatpush2.msra.mxu0 0.0
  %709 = vmatprep.subr.mxu0 0.0
  %710 = vmatpush2.msra.mxu0 0.0
  %711 = vmatprep.subr.mxu0 0.0
  %712 = vmatpush2.msra.mxu0 0.0
  %713 = vmatprep.subr.mxu0 0.0
  %714 = vmatpush2.msra.mxu0 0.0
  %715 = vmatprep.subr.mxu0 0.0
  %716 = vmatpush2.msra.mxu0 0.0
  %717 = vmatprep.subr.mxu0 0.0
  %718 = vmatpush2.msra.mxu0 0.0
  %719 = vmatprep.subr.mxu0 0.0
  %720 = vmatpush2.msra.mxu0 0.0
  %721 = vmatprep.subr.mxu0 0.0
  %722 = vmatpush2.msra.mxu0 0.0
  %723 = vmatprep.subr.mxu0 0.0
  %724 = vmatpush2.msra.mxu0 0.0
  %725 = vmatprep.subr.mxu0 0.0
  %726 = vmatpush2.msra.mxu0 0.0
  %727 = vmatprep.subr.mxu0 0.0
  %728 = vmatpush2.msra.mxu0 0.0
  %729 = vmatprep.subr.mxu0 0.0
  %730 = vmatpush2.msra.mxu0 0.0
  %731 = vmatprep.subr.mxu0 0.0
  %732 = vmatpush2.msra.mxu0 0.0
  %733 = vmatprep.subr.mxu0 0.0
  %734 = vmatpush2.msra.mxu0 0.0
  %735 = vmatprep.mubr.f32.mxu0 0.0
  %736 = vmatmul.mubr.f32.gmra.mxu0 %v669
  %v737 = vpop.f32.mrf.mxu0
  %v738 = vadd.f32 0.0, %v737
  %v739 = vpop.f32.mrf.mxu0
  %740 = vdwg.mxu0
  %v742 = vrot.slane %v738, 2
  %v744 = vadd.f32 %v119, %v742
  %v745 = vxor.u32 %v744, 2147483648
  %v746 = vmul.f32 %v745, 1.442695
  %v747 = vpow.pop %v746
  %v748 = vadd.f32 %v747, 1.0
  %v749 = vrcp.pop %v748
  %v750 = vmul.f32 1.0, %v749
  %v751 = vtanh.pop %v744
  %v753 = vrot.slane %v551, 6
  %v755 = vmul.f32 %v750, %v753
  %757 = vrot.lane.b32.xlu0 %v751, 64
  %v758 = vpop.permute.xlu0 %757
  %v760 = vmul.f32 %v750, %v758
  %762 = vrot.lane.b32.xlu0 %v760, 32
  %v763 = vpop.permute.xlu0 %762
  %v765 = vadd.f32 %v755, %v763
  %v766 = vtanh.pop %v765
  %768 = vrot.lane.b32.xlu0 %v766, 64
  %v769 = vpop.permute.xlu0 %768
  %v771 = vmul.f32 %v750, %v769
  %772 = vrot.lane.b32.xlu0 %v557, 32
  %v773 = vpop.permute.xlu0 %772
  %v776 = vrot.slane %v664, 4
  %777 = vrot.lane.b32.xlu0 %v776, 64
  %v778 = vpop.permute.xlu0 %777
  %v780 = vsel %vm146, %v773, %v778
  %v782 = vrot.slane %v780, 4
  %v783 = vsel %vm353, %v782, 0
  %785 = vmatprep.subr.mxu0 0.0
  %786 = vmatpush1.msra.mxu0 0.0
  %787 = vmatprep.subr.mxu0 0.0
  %788 = vmatpush1.msra.mxu0 0.0
  %789 = vmatprep.subr.mxu0 0.0
  %790 = vmatpush1.msra.mxu0 0.0
  %791 = vmatprep.subr.mxu0 0.0
  %792 = vmatpush1.msra.mxu0 0.0
  %793 = vmatprep.subr.mxu0 0.0
  %794 = vmatpush1.msra.mxu0 0.0
  %795 = vmatprep.subr.mxu0 0.0
  %796 = vmatpush1.msra.mxu0 0.0
  %797 = vmatprep.subr.mxu0 0.0
  %798 = vmatpush1.msra.mxu0 0.0
  %799 = vmatprep.subr.mxu0 0.0
  %800 = vmatpush1.msra.mxu0 0.0
  %801 = vmatprep.subr.mxu0 0.0
  %802 = vmatpush1.msra.mxu0 %v138
  %803 = vmatprep.subr.mxu0 0.0
  %804 = vmatpush1.msra.mxu0 %v137
  %805 = vmatprep.subr.mxu0 0.0
  %806 = vmatpush1.msra.mxu0 %v136
  %807 = vmatprep.subr.mxu0 0.0
  %808 = vmatpush1.msra.mxu0 %v135
  %809 = vmatprep.subr.mxu0 0.0
  %810 = vmatpush1.msra.mxu0 %v134
  %811 = vmatprep.subr.mxu0 0.0
  %812 = vmatpush1.msra.mxu0 %v133
  %813 = vmatprep.subr.mxu0 0.0
  %814 = vmatpush1.msra.mxu0 %v132
  %815 = vmatprep.subr.mxu0 0.0
  %816 = vmatpush1.msra.mxu0 %v131
  %817 = vmatprep.subr.mxu0 0.0
  %818 = vmatpush2.msra.mxu0 0.0
  %819 = vmatprep.subr.mxu0 0.0
  %820 = vmatpush2.msra.mxu0 0.0
  %821 = vmatprep.subr.mxu0 0.0
  %822 = vmatpush2.msra.mxu0 0.0
  %823 = vmatprep.subr.mxu0 0.0
  %824 = vmatpush2.msra.mxu0 0.0
  %825 = vmatprep.subr.mxu0 0.0
  %826 = vmatpush2.msra.mxu0 0.0
  %827 = vmatprep.subr.mxu0 0.0
  %828 = vmatpush2.msra.mxu0 0.0
  %829 = vmatprep.subr.mxu0 0.0
  %830 = vmatpush2.msra.mxu0 0.0
  %831 = vmatprep.subr.mxu0 0.0
  %832 = vmatpush2.msra.mxu0 0.0
  %833 = vmatprep.subr.mxu0 0.0
  %834 = vmatpush2.msra.mxu0 0.0
  %835 = vmatprep.subr.mxu0 0.0
  %836 = vmatpush2.msra.mxu0 0.0
  %837 = vmatprep.subr.mxu0 0.0
  %838 = vmatpush2.msra.mxu0 0.0
  %839 = vmatprep.subr.mxu0 0.0
  %840 = vmatpush2.msra.mxu0 0.0
  %841 = vmatprep.subr.mxu0 0.0
  %842 = vmatpush2.msra.mxu0 0.0
  %843 = vmatprep.subr.mxu0 0.0
  %844 = vmatpush2.msra.mxu0 0.0
  %845 = vmatprep.subr.mxu0 0.0
  %846 = vmatpush2.msra.mxu0 0.0
  %847 = vmatprep.subr.mxu0 0.0
  %848 = vmatpush2.msra.mxu0 0.0
  %849 = vmatprep.mubr.f32.mxu0 0.0
  %850 = vmatmul.mubr.f32.gmra.mxu0 %v783
  %v851 = vpop.f32.mrf.mxu0
  %v852 = vadd.f32 %v144, %v851
  %v853 = vpop.f32.mrf.mxu0
  %854 = vdwg.mxu0
  %v855 = vxor.u32 %v852, 2147483648
  %v856 = vmul.f32 %v855, 1.442695
  %v857 = vpow.pop %v856
  %v858 = vadd.f32 %v857, 1.0
  %v859 = vrcp.pop %v858
  %v860 = vmul.f32 1.0, %v859
  %v861 = vtanh.pop %v852
  %v862 = vmul.f32 %v860, %v658
  %864 = vrot.lane.b32.xlu0 %v861, 64
  %v865 = vpop.permute.xlu0 %864
  %v867 = vmul.f32 %v860, %v865
  %869 = vrot.lane.b32.xlu0 %v867, 32
  %v870 = vpop.permute.xlu0 %869
  %v872 = vadd.f32 %v862, %v870
  %v873 = vtanh.pop %v872
  %875 = vrot.lane.b32.xlu0 %v873, 64
  %v876 = vpop.permute.xlu0 %875
  %v878 = vmul.f32 %v860, %v876
  %v880 = vrot.slane %v771, 6
  %881 = vrot.lane.b32.xlu0 %v880, 32
  %v882 = vpop.permute.xlu0 %881
  %v883 = vsel %vm146, %v882, 0
  %885 = vmatprep.subr.mxu0 0.0
  %886 = vmatpush1.msra.mxu0 0.0
  %887 = vmatprep.subr.mxu0 0.0
  %888 = vmatpush1.msra.mxu0 0.0
  %889 = vmatprep.subr.mxu0 0.0
  %890 = vmatpush1.msra.mxu0 0.0
  %891 = vmatprep.subr.mxu0 0.0
  %892 = vmatpush1.msra.mxu0 0.0
  %893 = vmatprep.subr.mxu0 0.0
  %894 = vmatpush1.msra.mxu0 0.0
  %895 = vmatprep.subr.mxu0 0.0
  %896 = vmatpush1.msra.mxu0 0.0
  %897 = vmatprep.subr.mxu0 0.0
  %898 = vmatpush1.msra.mxu0 0.0
  %899 = vmatprep.subr.mxu0 0.0
  %900 = vmatpush1.msra.mxu0 0.0
  %901 = vmatprep.subr.mxu0 0.0
  %902 = vmatpush1.msra.mxu0 0.0
  %903 = vmatprep.subr.mxu0 0.0
  %904 = vmatpush1.msra.mxu0 0.0
  %905 = vmatprep.subr.mxu0 0.0
  %906 = vmatpush1.msra.mxu0 0.0
  %907 = vmatprep.subr.mxu0 0.0
  %908 = vmatpush1.msra.mxu0 0.0
  %909 = vmatprep.subr.mxu0 0.0
  %910 = vmatpush1.msra.mxu0 %v130
  %911 = vmatprep.subr.mxu0 0.0
  %912 = vmatpush1.msra.mxu0 %v129
  %913 = vmatprep.subr.mxu0 0.0
  %914 = vmatpush1.msra.mxu0 %v128
  %915 = vmatprep.subr.mxu0 0.0
  %916 = vmatpush1.msra.mxu0 %v127
  %917 = vmatprep.subr.mxu0 0.0
  %918 = vmatpush2.msra.mxu0 0.0
  %919 = vmatprep.subr.mxu0 0.0
  %920 = vmatpush2.msra.mxu0 0.0
  %921 = vmatprep.subr.mxu0 0.0
  %922 = vmatpush2.msra.mxu0 0.0
  %923 = vmatprep.subr.mxu0 0.0
  %924 = vmatpush2.msra.mxu0 0.0
  %925 = vmatprep.subr.mxu0 0.0
  %926 = vmatpush2.msra.mxu0 0.0
  %927 = vmatprep.subr.mxu0 0.0
  %928 = vmatpush2.msra.mxu0 0.0
  %929 = vmatprep.subr.mxu0 0.0
  %930 = vmatpush2.msra.mxu0 0.0
  %931 = vmatprep.subr.mxu0 0.0
  %932 = vmatpush2.msra.mxu0 0.0
  %933 = vmatprep.subr.mxu0 0.0
  %934 = vmatpush2.msra.mxu0 0.0
  %935 = vmatprep.subr.mxu0 0.0
  %936 = vmatpush2.msra.mxu0 0.0
  %937 = vmatprep.subr.mxu0 0.0
  %938 = vmatpush2.msra.mxu0 0.0
  %939 = vmatprep.subr.mxu0 0.0
  %940 = vmatpush2.msra.mxu0 0.0
  %941 = vmatprep.subr.mxu0 0.0
  %942 = vmatpush2.msra.mxu0 0.0
  %943 = vmatprep.subr.mxu0 0.0
  %944 = vmatpush2.msra.mxu0 0.0
  %945 = vmatprep.subr.mxu0 0.0
  %946 = vmatpush2.msra.mxu0 0.0
  %947 = vmatprep.subr.mxu0 0.0
  %948 = vmatpush2.msra.mxu0 0.0
  %949 = vmatprep.mubr.f32.mxu0 0.0
  %950 = vmatmul.mubr.f32.gmra.mxu0 %v883
  %v951 = vpop.f32.mrf.mxu0
  %v952 = vadd.f32 0.0, %v951
  %v953 = vpop.f32.mrf.mxu0
  %954 = vdwg.mxu0
  %v955 = vadd.f32 %v124, %v952
  %v956 = vxor.u32 %v955, 2147483648
  %v957 = vmul.f32 %v956, 1.442695
  %v958 = vpow.pop %v957
  %v959 = vadd.f32 %v958, 1.0
  %v960 = vrcp.pop %v959
  %v961 = vmul.f32 1.0, %v960
  %v962 = vtanh.pop %v955
  %v964 = vrot.slane %v765, 6
  %v966 = vmul.f32 %v961, %v964
  %968 = vrot.lane.b32.xlu0 %v962, 64
  %v969 = vpop.permute.xlu0 %968
  %v971 = vmul.f32 %v961, %v969
  %973 = vrot.lane.b32.xlu0 %v971, 32
  %v974 = vpop.permute.xlu0 %973
  %v976 = vadd.f32 %v966, %v974
  %v977 = vtanh.pop %v976
  %979 = vrot.lane.b32.xlu0 %v977, 64
  %v980 = vpop.permute.xlu0 %979
  %v982 = vmul.f32 %v961, %v980
  %983 = vrot.lane.b32.xlu0 %v771, 32
  %v984 = vpop.permute.xlu0 %983
  %v987 = vrot.slane %v878, 2
  %988 = vrot.lane.b32.xlu0 %v987, 64
  %v989 = vpop.permute.xlu0 %988
  %v991 = vsel %vm146, %v984, %v989
  %v993 = vrot.slane %v991, 6
  %v994 = vsel %vm353, %v993, 0
  %996 = vmatprep.subr.mxu0 0.0
  %997 = vmatpush1.msra.mxu0 0.0
  %998 = vmatprep.subr.mxu0 0.0
  %999 = vmatpush1.msra.mxu0 0.0
  %1000 = vmatprep.subr.mxu0 0.0
  %1001 = vmatpush1.msra.mxu0 0.0
  %1002 = vmatprep.subr.mxu0 0.0
  %1003 = vmatpush1.msra.mxu0 0.0
  %1004 = vmatprep.subr.mxu0 0.0
  %1005 = vmatpush1.msra.mxu0 0.0
  %1006 = vmatprep.subr.mxu0 0.0
  %1007 = vmatpush1.msra.mxu0 0.0
  %1008 = vmatprep.subr.mxu0 0.0
  %1009 = vmatpush1.msra.mxu0 0.0
  %1010 = vmatprep.subr.mxu0 0.0
  %1011 = vmatpush1.msra.mxu0 0.0
  %1012 = vmatprep.subr.mxu0 0.0
  %1013 = vmatpush1.msra.mxu0 %v138
  %1014 = vmatprep.subr.mxu0 0.0
  %1015 = vmatpush1.msra.mxu0 %v137
  %1016 = vmatprep.subr.mxu0 0.0
  %1017 = vmatpush1.msra.mxu0 %v136
  %1018 = vmatprep.subr.mxu0 0.0
  %1019 = vmatpush1.msra.mxu0 %v135
  %1020 = vmatprep.subr.mxu0 0.0
  %1021 = vmatpush1.msra.mxu0 %v134
  %1022 = vmatprep.subr.mxu0 0.0
  %1023 = vmatpush1.msra.mxu0 %v133
  %1024 = vmatprep.subr.mxu0 0.0
  %1025 = vmatpush1.msra.mxu0 %v132
  %1026 = vmatprep.subr.mxu0 0.0
  %1027 = vmatpush1.msra.mxu0 %v131
  %1028 = vmatprep.subr.mxu0 0.0
  %1029 = vmatpush2.msra.mxu0 0.0
  %1030 = vmatprep.subr.mxu0 0.0
  %1031 = vmatpush2.msra.mxu0 0.0
  %1032 = vmatprep.subr.mxu0 0.0
  %1033 = vmatpush2.msra.mxu0 0.0
  %1034 = vmatprep.subr.mxu0 0.0
  %1035 = vmatpush2.msra.mxu0 0.0
  %1036 = vmatprep.subr.mxu0 0.0
  %1037 = vmatpush2.msra.mxu0 0.0
  %1038 = vmatprep.subr.mxu0 0.0
  %1039 = vmatpush2.msra.mxu0 0.0
  %1040 = vmatprep.subr.mxu0 0.0
  %1041 = vmatpush2.msra.mxu0 0.0
  %1042 = vmatprep.subr.mxu0 0.0
  %1043 = vmatpush2.msra.mxu0 0.0
  %1044 = vmatprep.subr.mxu0 0.0
  %1045 = vmatpush2.msra.mxu0 0.0
  %1046 = vmatprep.subr.mxu0 0.0
  %1047 = vmatpush2.msra.mxu0 0.0
  %1048 = vmatprep.subr.mxu0 0.0
  %1049 = vmatpush2.msra.mxu0 0.0
  %1050 = vmatprep.subr.mxu0 0.0
  %1051 = vmatpush2.msra.mxu0 0.0
  %1052 = vmatprep.subr.mxu0 0.0
  %1053 = vmatpush2.msra.mxu0 0.0
  %1054 = vmatprep.subr.mxu0 0.0
  %1055 = vmatpush2.msra.mxu0 0.0
  %1056 = vmatprep.subr.mxu0 0.0
  %1057 = vmatpush2.msra.mxu0 0.0
  %1058 = vmatprep.subr.mxu0 0.0
  %1059 = vmatpush2.msra.mxu0 0.0
  %1060 = vmatprep.mubr.f32.mxu0 0.0
  %1061 = vmatmul.mubr.f32.gmra.mxu0 %v994
  %v1062 = vpop.f32.mrf.mxu0
  %v1063 = vadd.f32 %v144, %v1062
  %v1064 = vpop.f32.mrf.mxu0
  %1065 = vdwg.mxu0
  %v1066 = vxor.u32 %v1063, 2147483648
  %v1067 = vmul.f32 %v1066, 1.442695
  %v1068 = vpow.pop %v1067
  %v1069 = vadd.f32 %v1068, 1.0
  %v1070 = vrcp.pop %v1069
  %v1071 = vmul.f32 1.0, %v1070
  %v1072 = vtanh.pop %v1063
  %v1073 = vmul.f32 %v1071, %v872
  %1075 = vrot.lane.b32.xlu0 %v1072, 64
  %v1076 = vpop.permute.xlu0 %1075
  %v1078 = vmul.f32 %v1071, %v1076
  %1080 = vrot.lane.b32.xlu0 %v1078, 32
  %v1081 = vpop.permute.xlu0 %1080
  %v1083 = vadd.f32 %v1073, %v1081
  %v1084 = vtanh.pop %v1083
  %1086 = vrot.lane.b32.xlu0 %v1084, 64
  %v1087 = vpop.permute.xlu0 %1086
  %v1089 = vmul.f32 %v1071, %v1087
  %1091 = vrot.lane.b32.xlu0 %v982, 32
  %v1092 = vpop.permute.xlu0 %1091
  %v1093 = vsel %vm146, %v1092, 0
  %1095 = vmatprep.subr.mxu0 0.0
  %1096 = vmatpush1.msra.mxu0 0.0
  %1097 = vmatprep.subr.mxu0 0.0
  %1098 = vmatpush1.msra.mxu0 0.0
  %1099 = vmatprep.subr.mxu0 0.0
  %1100 = vmatpush1.msra.mxu0 0.0
  %1101 = vmatprep.subr.mxu0 0.0
  %1102 = vmatpush1.msra.mxu0 0.0
  %1103 = vmatprep.subr.mxu0 0.0
  %1104 = vmatpush1.msra.mxu0 0.0
  %1105 = vmatprep.subr.mxu0 0.0
  %1106 = vmatpush1.msra.mxu0 0.0
  %1107 = vmatprep.subr.mxu0 0.0
  %1108 = vmatpush1.msra.mxu0 0.0
  %1109 = vmatprep.subr.mxu0 0.0
  %1110 = vmatpush1.msra.mxu0 0.0
  %1111 = vmatprep.subr.mxu0 0.0
  %1112 = vmatpush1.msra.mxu0 0.0
  %1113 = vmatprep.subr.mxu0 0.0
  %1114 = vmatpush1.msra.mxu0 0.0
  %1115 = vmatprep.subr.mxu0 0.0
  %1116 = vmatpush1.msra.mxu0 0.0
  %1117 = vmatprep.subr.mxu0 0.0
  %1118 = vmatpush1.msra.mxu0 0.0
  %1119 = vmatprep.subr.mxu0 0.0
  %1120 = vmatpush1.msra.mxu0 %v130
  %1121 = vmatprep.subr.mxu0 0.0
  %1122 = vmatpush1.msra.mxu0 %v129
  %1123 = vmatprep.subr.mxu0 0.0
  %1124 = vmatpush1.msra.mxu0 %v128
  %1125 = vmatprep.subr.mxu0 0.0
  %1126 = vmatpush1.msra.mxu0 %v127
  %1127 = vmatprep.subr.mxu0 0.0
  %1128 = vmatpush2.msra.mxu0 0.0
  %1129 = vmatprep.subr.mxu0 0.0
  %1130 = vmatpush2.msra.mxu0 0.0
  %1131 = vmatprep.subr.mxu0 0.0
  %1132 = vmatpush2.msra.mxu0 0.0
  %1133 = vmatprep.subr.mxu0 0.0
  %1134 = vmatpush2.msra.mxu0 0.0
  %1135 = vmatprep.subr.mxu0 0.0
  %1136 = vmatpush2.msra.mxu0 0.0
  %1137 = vmatprep.subr.mxu0 0.0
  %1138 = vmatpush2.msra.mxu0 0.0
  %1139 = vmatprep.subr.mxu0 0.0
  %1140 = vmatpush2.msra.mxu0 0.0
  %1141 = vmatprep.subr.mxu0 0.0
  %1142 = vmatpush2.msra.mxu0 0.0
  %1143 = vmatprep.subr.mxu0 0.0
  %1144 = vmatpush2.msra.mxu0 0.0
  %1145 = vmatprep.subr.mxu0 0.0
  %1146 = vmatpush2.msra.mxu0 0.0
  %1147 = vmatprep.subr.mxu0 0.0
  %1148 = vmatpush2.msra.mxu0 0.0
  %1149 = vmatprep.subr.mxu0 0.0
  %1150 = vmatpush2.msra.mxu0 0.0
  %1151 = vmatprep.subr.mxu0 0.0
  %1152 = vmatpush2.msra.mxu0 0.0
  %1153 = vmatprep.subr.mxu0 0.0
  %1154 = vmatpush2.msra.mxu0 0.0
  %1155 = vmatprep.subr.mxu0 0.0
  %1156 = vmatpush2.msra.mxu0 0.0
  %1157 = vmatprep.subr.mxu0 0.0
  %1158 = vmatpush2.msra.mxu0 0.0
  %1159 = vmatprep.mubr.f32.mxu0 0.0
  %1160 = vmatmul.mubr.f32.gmra.mxu0 %v1093
  %v1161 = vpop.f32.mrf.mxu0
  %v1162 = vadd.f32 0.0, %v1161
  %v1163 = vpop.f32.mrf.mxu0
  %1164 = vdwg.mxu0
  %v1166 = vrot.slane %v1162, 6
  %v1168 = vadd.f32 %v124, %v1166
  %v1169 = vxor.u32 %v1168, 2147483648
  %v1170 = vmul.f32 %v1169, 1.442695
  %v1171 = vpow.pop %v1170
  %v1172 = vadd.f32 %v1171, 1.0
  %v1173 = vrcp.pop %v1172
  %v1174 = vmul.f32 1.0, %v1173
  %v1175 = vtanh.pop %v1168
  %v1177 = vrot.slane %v976, 6
  %v1179 = vmul.f32 %v1174, %v1177
  %1181 = vrot.lane.b32.xlu0 %v1175, 64
  %v1182 = vpop.permute.xlu0 %1181
  %v1184 = vmul.f32 %v1174, %v1182
  %1186 = vrot.lane.b32.xlu0 %v1184, 32
  %v1187 = vpop.permute.xlu0 %1186
  %v1189 = vadd.f32 %v1179, %v1187
  %v1190 = vtanh.pop %v1189
  %1192 = vrot.lane.b32.xlu0 %v1190, 64
  %v1193 = vpop.permute.xlu0 %1192
  %v1195 = vmul.f32 %v1174, %v1193
  %1198 = vrot.lane.b32.xlu0 %v1089, 64
  %v1199 = vpop.permute.xlu0 %1198
  %v1201 = vsel %vm146, %v1092, %v1199
  %v1203 = vsel %vm353, %v1201, 0
  %1205 = vmatprep.subr.mxu0 0.0
  %1206 = vmatpush1.msra.mxu0 0.0
  %1207 = vmatprep.subr.mxu0 0.0
  %1208 = vmatpush1.msra.mxu0 0.0
  %1209 = vmatprep.subr.mxu0 0.0
  %1210 = vmatpush1.msra.mxu0 0.0
  %1211 = vmatprep.subr.mxu0 0.0
  %1212 = vmatpush1.msra.mxu0 0.0
  %1213 = vmatprep.subr.mxu0 0.0
  %1214 = vmatpush1.msra.mxu0 0.0
  %1215 = vmatprep.subr.mxu0 0.0
  %1216 = vmatpush1.msra.mxu0 0.0
  %1217 = vmatprep.subr.mxu0 0.0
  %1218 = vmatpush1.msra.mxu0 0.0
  %1219 = vmatprep.subr.mxu0 0.0
  %1220 = vmatpush1.msra.mxu0 0.0
  %1221 = vmatprep.subr.mxu0 0.0
  %1222 = vmatpush1.msra.mxu0 %v138
  %1223 = vmatprep.subr.mxu0 0.0
  %1224 = vmatpush1.msra.mxu0 %v137
  %1225 = vmatprep.subr.mxu0 0.0
  %1226 = vmatpush1.msra.mxu0 %v136
  %1227 = vmatprep.subr.mxu0 0.0
  %1228 = vmatpush1.msra.mxu0 %v135
  %1229 = vmatprep.subr.mxu0 0.0
  %1230 = vmatpush1.msra.mxu0 %v134
  %1231 = vmatprep.subr.mxu0 0.0
  %1232 = vmatpush1.msra.mxu0 %v133
  %1233 = vmatprep.subr.mxu0 0.0
  %1234 = vmatpush1.msra.mxu0 %v132
  %1235 = vmatprep.subr.mxu0 0.0
  %1236 = vmatpush1.msra.mxu0 %v131
  %1237 = vmatprep.subr.mxu0 0.0
  %1238 = vmatpush2.msra.mxu0 0.0
  %1239 = vmatprep.subr.mxu0 0.0
  %1240 = vmatpush2.msra.mxu0 0.0
  %1241 = vmatprep.subr.mxu0 0.0
  %1242 = vmatpush2.msra.mxu0 0.0
  %1243 = vmatprep.subr.mxu0 0.0
  %1244 = vmatpush2.msra.mxu0 0.0
  %1245 = vmatprep.subr.mxu0 0.0
  %1246 = vmatpush2.msra.mxu0 0.0
  %1247 = vmatprep.subr.mxu0 0.0
  %1248 = vmatpush2.msra.mxu0 0.0
  %1249 = vmatprep.subr.mxu0 0.0
  %1250 = vmatpush2.msra.mxu0 0.0
  %1251 = vmatprep.subr.mxu0 0.0
  %1252 = vmatpush2.msra.mxu0 0.0
  %1253 = vmatprep.subr.mxu0 0.0
  %1254 = vmatpush2.msra.mxu0 0.0
  %1255 = vmatprep.subr.mxu0 0.0
  %1256 = vmatpush2.msra.mxu0 0.0
  %1257 = vmatprep.subr.mxu0 0.0
  %1258 = vmatpush2.msra.mxu0 0.0
  %1259 = vmatprep.subr.mxu0 0.0
  %1260 = vmatpush2.msra.mxu0 0.0
  %1261 = vmatprep.subr.mxu0 0.0
  %1262 = vmatpush2.msra.mxu0 0.0
  %1263 = vmatprep.subr.mxu0 0.0
  %1264 = vmatpush2.msra.mxu0 0.0
  %1265 = vmatprep.subr.mxu0 0.0
  %1266 = vmatpush2.msra.mxu0 0.0
  %1267 = vmatprep.subr.mxu0 0.0
  %1268 = vmatpush2.msra.mxu0 0.0
  %1269 = vmatprep.mubr.f32.mxu0 0.0
  %1270 = vmatmul.mubr.f32.gmra.mxu0 %v1203
  %v1271 = vpop.f32.mrf.mxu0
  %v1272 = vadd.f32 %v144, %v1271
  %v1273 = vpop.f32.mrf.mxu0
  %1274 = vdwg.mxu0
  %v1275 = vxor.u32 %v1272, 2147483648
  %v1276 = vmul.f32 %v1275, 1.442695
  %v1277 = vpow.pop %v1276
  %v1278 = vadd.f32 %v1277, 1.0
  %v1279 = vrcp.pop %v1278
  %v1280 = vmul.f32 1.0, %v1279
  %v1281 = vtanh.pop %v1272
  %v1282 = vmul.f32 %v1280, %v1083
  %1284 = vrot.lane.b32.xlu0 %v1281, 64
  %v1285 = vpop.permute.xlu0 %1284
  %v1287 = vmul.f32 %v1280, %v1285
  %1289 = vrot.lane.b32.xlu0 %v1287, 32
  %v1290 = vpop.permute.xlu0 %1289
  %v1292 = vadd.f32 %v1282, %v1290
  %v1293 = vtanh.pop %v1292
  %1295 = vrot.lane.b32.xlu0 %v1293, 64
  %v1296 = vpop.permute.xlu0 %1295
  %v1298 = vmul.f32 %v1280, %v1296
  %v1300 = vrot.slane %v1195, 2
  %1301 = vrot.lane.b32.xlu0 %v1300, 32
  %v1302 = vpop.permute.xlu0 %1301
  %v1303 = vsel %vm146, %v1302, 0
  %1305 = vmatprep.subr.mxu0 0.0
  %1306 = vmatpush1.msra.mxu0 0.0
  %1307 = vmatprep.subr.mxu0 0.0
  %1308 = vmatpush1.msra.mxu0 0.0
  %1309 = vmatprep.subr.mxu0 0.0
  %1310 = vmatpush1.msra.mxu0 0.0
  %1311 = vmatprep.subr.mxu0 0.0
  %1312 = vmatpush1.msra.mxu0 0.0
  %1313 = vmatprep.subr.mxu0 0.0
  %1314 = vmatpush1.msra.mxu0 0.0
  %1315 = vmatprep.subr.mxu0 0.0
  %1316 = vmatpush1.msra.mxu0 0.0
  %1317 = vmatprep.subr.mxu0 0.0
  %1318 = vmatpush1.msra.mxu0 0.0
  %1319 = vmatprep.subr.mxu0 0.0
  %1320 = vmatpush1.msra.mxu0 0.0
  %1321 = vmatprep.subr.mxu0 0.0
  %1322 = vmatpush1.msra.mxu0 0.0
  %1323 = vmatprep.subr.mxu0 0.0
  %1324 = vmatpush1.msra.mxu0 0.0
  %1325 = vmatprep.subr.mxu0 0.0
  %1326 = vmatpush1.msra.mxu0 0.0
  %1327 = vmatprep.subr.mxu0 0.0
  %1328 = vmatpush1.msra.mxu0 0.0
  %1329 = vmatprep.subr.mxu0 0.0
  %1330 = vmatpush1.msra.mxu0 %v130
  %1331 = vmatprep.subr.mxu0 0.0
  %1332 = vmatpush1.msra.mxu0 %v129
  %1333 = vmatprep.subr.mxu0 0.0
  %1334 = vmatpush1.msra.mxu0 %v128
  %1335 = vmatprep.subr.mxu0 0.0
  %1336 = vmatpush1.msra.mxu0 %v127
  %1337 = vmatprep.subr.mxu0 0.0
  %1338 = vmatpush2.msra.mxu0 0.0
  %1339 = vmatprep.subr.mxu0 0.0
  %1340 = vmatpush2.msra.mxu0 0.0
  %1341 = vmatprep.subr.mxu0 0.0
  %1342 = vmatpush2.msra.mxu0 0.0
  %1343 = vmatprep.subr.mxu0 0.0
  %1344 = vmatpush2.msra.mxu0 0.0
  %1345 = vmatprep.subr.mxu0 0.0
  %1346 = vmatpush2.msra.mxu0 0.0
  %1347 = vmatprep.subr.mxu0 0.0
  %1348 = vmatpush2.msra.mxu0 0.0
  %1349 = vmatprep.subr.mxu0 0.0
  %1350 = vmatpush2.msra.mxu0 0.0
  %1351 = vmatprep.subr.mxu0 0.0
  %1352 = vmatpush2.msra.mxu0 0.0
  %1353 = vmatprep.subr.mxu0 0.0
  %1354 = vmatpush2.msra.mxu0 0.0
  %1355 = vmatprep.subr.mxu0 0.0
  %1356 = vmatpush2.msra.mxu0 0.0
  %1357 = vmatprep.subr.mxu0 0.0
  %1358 = vmatpush2.msra.mxu0 0.0
  %1359 = vmatprep.subr.mxu0 0.0
  %1360 = vmatpush2.msra.mxu0 0.0
  %1361 = vmatprep.subr.mxu0 0.0
  %1362 = vmatpush2.msra.mxu0 0.0
  %1363 = vmatprep.subr.mxu0 0.0
  %1364 = vmatpush2.msra.mxu0 0.0
  %1365 = vmatprep.subr.mxu0 0.0
  %1366 = vmatpush2.msra.mxu0 0.0
  %1367 = vmatprep.subr.mxu0 0.0
  %1368 = vmatpush2.msra.mxu0 0.0
  %1369 = vmatprep.mubr.f32.mxu0 0.0
  %1370 = vmatmul.mubr.f32.gmra.mxu0 %v1303
  %v1371 = vpop.f32.mrf.mxu0
  %v1372 = vadd.f32 0.0, %v1371
  %v1373 = vpop.f32.mrf.mxu0
  %1374 = vdwg.mxu0
  %v1376 = vrot.slane %v1372, 4
  %v1378 = vadd.f32 %v124, %v1376
  %v1379 = vxor.u32 %v1378, 2147483648
  %v1380 = vmul.f32 %v1379, 1.442695
  %v1381 = vpow.pop %v1380
  %v1382 = vadd.f32 %v1381, 1.0
  %v1383 = vrcp.pop %v1382
  %v1384 = vmul.f32 1.0, %v1383
  %v1385 = vtanh.pop %v1378
  %v1387 = vrot.slane %v1189, 6
  %v1389 = vmul.f32 %v1384, %v1387
  %1391 = vrot.lane.b32.xlu0 %v1385, 64
  %v1392 = vpop.permute.xlu0 %1391
  %v1394 = vmul.f32 %v1384, %v1392
  %1396 = vrot.lane.b32.xlu0 %v1394, 32
  %v1397 = vpop.permute.xlu0 %1396
  %v1399 = vadd.f32 %v1389, %v1397
  %v1400 = vtanh.pop %v1399
  %1402 = vrot.lane.b32.xlu0 %v1400, 64
  %v1403 = vpop.permute.xlu0 %1402
  %v1405 = vmul.f32 %v1384, %v1403
  %1406 = vrot.lane.b32.xlu0 %v1195, 32
  %v1407 = vpop.permute.xlu0 %1406
  %v1410 = vrot.slane %v1298, 6
  %1411 = vrot.lane.b32.xlu0 %v1410, 64
  %v1412 = vpop.permute.xlu0 %1411
  %v1414 = vsel %vm146, %v1407, %v1412
  %v1416 = vrot.slane %v1414, 2
  %v1417 = vsel %vm353, %v1416, 0
  %1419 = vmatprep.subr.mxu0 0.0
  %1420 = vmatpush1.msra.mxu0 0.0
  %1421 = vmatprep.subr.mxu0 0.0
  %1422 = vmatpush1.msra.mxu0 0.0
  %1423 = vmatprep.subr.mxu0 0.0
  %1424 = vmatpush1.msra.mxu0 0.0
  %1425 = vmatprep.subr.mxu0 0.0
  %1426 = vmatpush1.msra.mxu0 0.0
  %1427 = vmatprep.subr.mxu0 0.0
  %1428 = vmatpush1.msra.mxu0 0.0
  %1429 = vmatprep.subr.mxu0 0.0
  %1430 = vmatpush1.msra.mxu0 0.0
  %1431 = vmatprep.subr.mxu0 0.0
  %1432 = vmatpush1.msra.mxu0 0.0
  %1433 = vmatprep.subr.mxu0 0.0
  %1434 = vmatpush1.msra.mxu0 0.0
  %1435 = vmatprep.subr.mxu0 0.0
  %1436 = vmatpush1.msra.mxu0 %v138
  %1437 = vmatprep.subr.mxu0 0.0
  %1438 = vmatpush1.msra.mxu0 %v137
  %1439 = vmatprep.subr.mxu0 0.0
  %1440 = vmatpush1.msra.mxu0 %v136
  %1441 = vmatprep.subr.mxu0 0.0
  %1442 = vmatpush1.msra.mxu0 %v135
  %1443 = vmatprep.subr.mxu0 0.0
  %1444 = vmatpush1.msra.mxu0 %v134
  %1445 = vmatprep.subr.mxu0 0.0
  %1446 = vmatpush1.msra.mxu0 %v133
  %1447 = vmatprep.subr.mxu0 0.0
  %1448 = vmatpush1.msra.mxu0 %v132
  %1449 = vmatprep.subr.mxu0 0.0
  %1450 = vmatpush1.msra.mxu0 %v131
  %1451 = vmatprep.subr.mxu0 0.0
  %1452 = vmatpush2.msra.mxu0 0.0
  %1453 = vmatprep.subr.mxu0 0.0
  %1454 = vmatpush2.msra.mxu0 0.0
  %1455 = vmatprep.subr.mxu0 0.0
  %1456 = vmatpush2.msra.mxu0 0.0
  %1457 = vmatprep.subr.mxu0 0.0
  %1458 = vmatpush2.msra.mxu0 0.0
  %1459 = vmatprep.subr.mxu0 0.0
  %1460 = vmatpush2.msra.mxu0 0.0
  %1461 = vmatprep.subr.mxu0 0.0
  %1462 = vmatpush2.msra.mxu0 0.0
  %1463 = vmatprep.subr.mxu0 0.0
  %1464 = vmatpush2.msra.mxu0 0.0
  %1465 = vmatprep.subr.mxu0 0.0
  %1466 = vmatpush2.msra.mxu0 0.0
  %1467 = vmatprep.subr.mxu0 0.0
  %1468 = vmatpush2.msra.mxu0 0.0
  %1469 = vmatprep.subr.mxu0 0.0
  %1470 = vmatpush2.msra.mxu0 0.0
  %1471 = vmatprep.subr.mxu0 0.0
  %1472 = vmatpush2.msra.mxu0 0.0
  %1473 = vmatprep.subr.mxu0 0.0
  %1474 = vmatpush2.msra.mxu0 0.0
  %1475 = vmatprep.subr.mxu0 0.0
  %1476 = vmatpush2.msra.mxu0 0.0
  %1477 = vmatprep.subr.mxu0 0.0
  %1478 = vmatpush2.msra.mxu0 0.0
  %1479 = vmatprep.subr.mxu0 0.0
  %1480 = vmatpush2.msra.mxu0 0.0
  %1481 = vmatprep.subr.mxu0 0.0
  %1482 = vmatpush2.msra.mxu0 0.0
  %1483 = vmatprep.mubr.f32.mxu0 0.0
  %1484 = vmatmul.mubr.f32.gmra.mxu0 %v1417
  %v1485 = vpop.f32.mrf.mxu0
  %v1486 = vadd.f32 %v144, %v1485
  %v1487 = vpop.f32.mrf.mxu0
  %1488 = vdwg.mxu0
  %v1489 = vxor.u32 %v1486, 2147483648
  %v1490 = vmul.f32 %v1489, 1.442695
  %v1491 = vpow.pop %v1490
  %v1492 = vadd.f32 %v1491, 1.0
  %v1493 = vrcp.pop %v1492
  %v1494 = vmul.f32 1.0, %v1493
  %v1495 = vtanh.pop %v1486
  %v1496 = vmul.f32 %v1494, %v1292
  %1498 = vrot.lane.b32.xlu0 %v1495, 64
  %v1499 = vpop.permute.xlu0 %1498
  %v1501 = vmul.f32 %v1494, %v1499
  %1503 = vrot.lane.b32.xlu0 %v1501, 32
  %v1504 = vpop.permute.xlu0 %1503
  %v1506 = vadd.f32 %v1496, %v1504
  %v1507 = vtanh.pop %v1506
  %1509 = vrot.lane.b32.xlu0 %v1507, 64
  %v1510 = vpop.permute.xlu0 %1509
  %v1512 = vmul.f32 %v1494, %v1510
  %v1514 = vrot.slane %v1405, 4
  %1515 = vrot.lane.b32.xlu0 %v1514, 32
  %v1516 = vpop.permute.xlu0 %1515
  %v1517 = vsel %vm146, %v1516, 0
  %1519 = vmatprep.subr.mxu0 0.0
  %1520 = vmatpush1.msra.mxu0 0.0
  %1521 = vmatprep.subr.mxu0 0.0
  %1522 = vmatpush1.msra.mxu0 0.0
  %1523 = vmatprep.subr.mxu0 0.0
  %1524 = vmatpush1.msra.mxu0 0.0
  %1525 = vmatprep.subr.mxu0 0.0
  %1526 = vmatpush1.msra.mxu0 0.0
  %1527 = vmatprep.subr.mxu0 0.0
  %1528 = vmatpush1.msra.mxu0 0.0
  %1529 = vmatprep.subr.mxu0 0.0
  %1530 = vmatpush1.msra.mxu0 0.0
  %1531 = vmatprep.subr.mxu0 0.0
  %1532 = vmatpush1.msra.mxu0 0.0
  %1533 = vmatprep.subr.mxu0 0.0
  %1534 = vmatpush1.msra.mxu0 0.0
  %1535 = vmatprep.subr.mxu0 0.0
  %1536 = vmatpush1.msra.mxu0 0.0
  %1537 = vmatprep.subr.mxu0 0.0
  %1538 = vmatpush1.msra.mxu0 0.0
  %1539 = vmatprep.subr.mxu0 0.0
  %1540 = vmatpush1.msra.mxu0 0.0
  %1541 = vmatprep.subr.mxu0 0.0
  %1542 = vmatpush1.msra.mxu0 0.0
  %1543 = vmatprep.subr.mxu0 0.0
  %1544 = vmatpush1.msra.mxu0 %v130
  %1545 = vmatprep.subr.mxu0 0.0
  %1546 = vmatpush1.msra.mxu0 %v129
  %1547 = vmatprep.subr.mxu0 0.0
  %1548 = vmatpush1.msra.mxu0 %v128
  %1549 = vmatprep.subr.mxu0 0.0
  %1550 = vmatpush1.msra.mxu0 %v127
  %1551 = vmatprep.subr.mxu0 0.0
  %1552 = vmatpush2.msra.mxu0 0.0
  %1553 = vmatprep.subr.mxu0 0.0
  %1554 = vmatpush2.msra.mxu0 0.0
  %1555 = vmatprep.subr.mxu0 0.0
  %1556 = vmatpush2.msra.mxu0 0.0
  %1557 = vmatprep.subr.mxu0 0.0
  %1558 = vmatpush2.msra.mxu0 0.0
  %1559 = vmatprep.subr.mxu0 0.0
  %1560 = vmatpush2.msra.mxu0 0.0
  %1561 = vmatprep.subr.mxu0 0.0
  %1562 = vmatpush2.msra.mxu0 0.0
  %1563 = vmatprep.subr.mxu0 0.0
  %1564 = vmatpush2.msra.mxu0 0.0
  %1565 = vmatprep.subr.mxu0 0.0
  %1566 = vmatpush2.msra.mxu0 0.0
  %1567 = vmatprep.subr.mxu0 0.0
  %1568 = vmatpush2.msra.mxu0 0.0
  %1569 = vmatprep.subr.mxu0 0.0
  %1570 = vmatpush2.msra.mxu0 0.0
  %1571 = vmatprep.subr.mxu0 0.0
  %1572 = vmatpush2.msra.mxu0 0.0
  %1573 = vmatprep.subr.mxu0 0.0
  %1574 = vmatpush2.msra.mxu0 0.0
  %1575 = vmatprep.subr.mxu0 0.0
  %1576 = vmatpush2.msra.mxu0 0.0
  %1577 = vmatprep.subr.mxu0 0.0
  %1578 = vmatpush2.msra.mxu0 0.0
  %1579 = vmatprep.subr.mxu0 0.0
  %1580 = vmatpush2.msra.mxu0 0.0
  %1581 = vmatprep.subr.mxu0 0.0
  %1582 = vmatpush2.msra.mxu0 0.0
  %1583 = vmatprep.mubr.f32.mxu0 0.0
  %1584 = vmatmul.mubr.f32.gmra.mxu0 %v1517
  %v1585 = vpop.f32.mrf.mxu0
  %v1586 = vadd.f32 0.0, %v1585
  %v1587 = vpop.f32.mrf.mxu0
  %1588 = vdwg.mxu0
  %v1590 = vrot.slane %v1586, 2
  %v1592 = vadd.f32 %v124, %v1590
  %v1593 = vxor.u32 %v1592, 2147483648
  %v1594 = vmul.f32 %v1593, 1.442695
  %v1595 = vpow.pop %v1594
  %v1596 = vadd.f32 %v1595, 1.0
  %v1597 = vrcp.pop %v1596
  %v1598 = vmul.f32 1.0, %v1597
  %v1599 = vtanh.pop %v1592
  %v1601 = vrot.slane %v1399, 6
  %v1603 = vmul.f32 %v1598, %v1601
  %1605 = vrot.lane.b32.xlu0 %v1599, 64
  %v1606 = vpop.permute.xlu0 %1605
  %v1608 = vmul.f32 %v1598, %v1606
  %1610 = vrot.lane.b32.xlu0 %v1608, 32
  %v1611 = vpop.permute.xlu0 %1610
  %v1613 = vadd.f32 %v1603, %v1611
  %v1614 = vtanh.pop %v1613
  %1616 = vrot.lane.b32.xlu0 %v1614, 64
  %v1617 = vpop.permute.xlu0 %1616
  %v1619 = vmul.f32 %v1598, %v1617
  %1620 = vrot.lane.b32.xlu0 %v1405, 32
  %v1621 = vpop.permute.xlu0 %1620
  %v1624 = vrot.slane %v1512, 4
  %1625 = vrot.lane.b32.xlu0 %v1624, 64
  %v1626 = vpop.permute.xlu0 %1625
  %v1628 = vsel %vm146, %v1621, %v1626
  %v1630 = vrot.slane %v1628, 4
  %v1631 = vsel %vm353, %v1630, 0
  %1633 = vmatprep.subr.mxu0 0.0
  %1634 = vmatpush1.msra.mxu0 0.0
  %1635 = vmatprep.subr.mxu0 0.0
  %1636 = vmatpush1.msra.mxu0 0.0
  %1637 = vmatprep.subr.mxu0 0.0
  %1638 = vmatpush1.msra.mxu0 0.0
  %1639 = vmatprep.subr.mxu0 0.0
  %1640 = vmatpush1.msra.mxu0 0.0
  %1641 = vmatprep.subr.mxu0 0.0
  %1642 = vmatpush1.msra.mxu0 0.0
  %1643 = vmatprep.subr.mxu0 0.0
  %1644 = vmatpush1.msra.mxu0 0.0
  %1645 = vmatprep.subr.mxu0 0.0
  %1646 = vmatpush1.msra.mxu0 0.0
  %1647 = vmatprep.subr.mxu0 0.0
  %1648 = vmatpush1.msra.mxu0 0.0
  %1649 = vmatprep.subr.mxu0 0.0
  %1650 = vmatpush1.msra.mxu0 %v138
  %1651 = vmatprep.subr.mxu0 0.0
  %1652 = vmatpush1.msra.mxu0 %v137
  %1653 = vmatprep.subr.mxu0 0.0
  %1654 = vmatpush1.msra.mxu0 %v136
  %1655 = vmatprep.subr.mxu0 0.0
  %1656 = vmatpush1.msra.mxu0 %v135
  %1657 = vmatprep.subr.mxu0 0.0
  %1658 = vmatpush1.msra.mxu0 %v134
  %1659 = vmatprep.subr.mxu0 0.0
  %1660 = vmatpush1.msra.mxu0 %v133
  %1661 = vmatprep.subr.mxu0 0.0
  %1662 = vmatpush1.msra.mxu0 %v132
  %1663 = vmatprep.subr.mxu0 0.0
  %1664 = vmatpush1.msra.mxu0 %v131
  %1665 = vmatprep.subr.mxu0 0.0
  %1666 = vmatpush2.msra.mxu0 0.0
  %1667 = vmatprep.subr.mxu0 0.0
  %1668 = vmatpush2.msra.mxu0 0.0
  %1669 = vmatprep.subr.mxu0 0.0
  %1670 = vmatpush2.msra.mxu0 0.0
  %1671 = vmatprep.subr.mxu0 0.0
  %1672 = vmatpush2.msra.mxu0 0.0
  %1673 = vmatprep.subr.mxu0 0.0
  %1674 = vmatpush2.msra.mxu0 0.0
  %1675 = vmatprep.subr.mxu0 0.0
  %1676 = vmatpush2.msra.mxu0 0.0
  %1677 = vmatprep.subr.mxu0 0.0
  %1678 = vmatpush2.msra.mxu0 0.0
  %1679 = vmatprep.subr.mxu0 0.0
  %1680 = vmatpush2.msra.mxu0 0.0
  %1681 = vmatprep.subr.mxu0 0.0
  %1682 = vmatpush2.msra.mxu0 0.0
  %1683 = vmatprep.subr.mxu0 0.0
  %1684 = vmatpush2.msra.mxu0 0.0
  %1685 = vmatprep.subr.mxu0 0.0
  %1686 = vmatpush2.msra.mxu0 0.0
  %1687 = vmatprep.subr.mxu0 0.0
  %1688 = vmatpush2.msra.mxu0 0.0
  %1689 = vmatprep.subr.mxu0 0.0
  %1690 = vmatpush2.msra.mxu0 0.0
  %1691 = vmatprep.subr.mxu0 0.0
  %1692 = vmatpush2.msra.mxu0 0.0
  %1693 = vmatprep.subr.mxu0 0.0
  %1694 = vmatpush2.msra.mxu0 0.0
  %1695 = vmatprep.subr.mxu0 0.0
  %1696 = vmatpush2.msra.mxu0 0.0
  %1697 = vmatprep.mubr.f32.mxu0 0.0
  %1698 = vmatmul.mubr.f32.gmra.mxu0 %v1631
  %v1699 = vpop.f32.mrf.mxu0
  %v1700 = vadd.f32 %v144, %v1699
  %v1701 = vpop.f32.mrf.mxu0
  %1702 = vdwg.mxu0
  %v1703 = vxor.u32 %v1700, 2147483648
  %v1704 = vmul.f32 %v1703, 1.442695
  %v1705 = vpow.pop %v1704
  %v1706 = vadd.f32 %v1705, 1.0
  %v1707 = vrcp.pop %v1706
  %v1708 = vmul.f32 1.0, %v1707
  %v1709 = vtanh.pop %v1700
  %v1710 = vmul.f32 %v1708, %v1506
  %1712 = vrot.lane.b32.xlu0 %v1709, 64
  %v1713 = vpop.permute.xlu0 %1712
  %v1715 = vmul.f32 %v1708, %v1713
  %1717 = vrot.lane.b32.xlu0 %v1715, 32
  %v1718 = vpop.permute.xlu0 %1717
  %v1720 = vadd.f32 %v1710, %v1718
  %v1721 = vtanh.pop %v1720
  %1723 = vrot.lane.b32.xlu0 %v1721, 64
  %v1724 = vpop.permute.xlu0 %1723
  %v1726 = vmul.f32 %v1708, %v1724
  %1728 = vrot.lane.b32.xlu0 %v1619, 32
  %v1729 = vpop.permute.xlu0 %1728
  %v1732 = vrot.slane %v1726, 2
  %1733 = vrot.lane.b32.xlu0 %v1732, 64
  %v1734 = vpop.permute.xlu0 %1733
  %v1736 = vsel %vm146, %v1729, %v1734
  %v1738 = vrot.slane %v1736, 6
  %v1739 = vsel %vm353, %v1738, 0
  %1741 = vmatprep.subr.mxu0 0.0
  %1742 = vmatpush1.msra.mxu0 0.0
  %1743 = vmatprep.subr.mxu0 0.0
  %1744 = vmatpush1.msra.mxu0 0.0
  %1745 = vmatprep.subr.mxu0 0.0
  %1746 = vmatpush1.msra.mxu0 0.0
  %1747 = vmatprep.subr.mxu0 0.0
  %1748 = vmatpush1.msra.mxu0 0.0
  %1749 = vmatprep.subr.mxu0 0.0
  %1750 = vmatpush1.msra.mxu0 0.0
  %1751 = vmatprep.subr.mxu0 0.0
  %1752 = vmatpush1.msra.mxu0 0.0
  %1753 = vmatprep.subr.mxu0 0.0
  %1754 = vmatpush1.msra.mxu0 0.0
  %1755 = vmatprep.subr.mxu0 0.0
  %1756 = vmatpush1.msra.mxu0 0.0
  %1757 = vmatprep.subr.mxu0 0.0
  %1758 = vmatpush1.msra.mxu0 %v138
  %1759 = vmatprep.subr.mxu0 0.0
  %1760 = vmatpush1.msra.mxu0 %v137
  %1761 = vmatprep.subr.mxu0 0.0
  %1762 = vmatpush1.msra.mxu0 %v136
  %1763 = vmatprep.subr.mxu0 0.0
  %1764 = vmatpush1.msra.mxu0 %v135
  %1765 = vmatprep.subr.mxu0 0.0
  %1766 = vmatpush1.msra.mxu0 %v134
  %1767 = vmatprep.subr.mxu0 0.0
  %1768 = vmatpush1.msra.mxu0 %v133
  %1769 = vmatprep.subr.mxu0 0.0
  %1770 = vmatpush1.msra.mxu0 %v132
  %1771 = vmatprep.subr.mxu0 0.0
  %1772 = vmatpush1.msra.mxu0 %v131
  %1773 = vmatprep.subr.mxu0 0.0
  %1774 = vmatpush2.msra.mxu0 0.0
  %1775 = vmatprep.subr.mxu0 0.0
  %1776 = vmatpush2.msra.mxu0 0.0
  %1777 = vmatprep.subr.mxu0 0.0
  %1778 = vmatpush2.msra.mxu0 0.0
  %1779 = vmatprep.subr.mxu0 0.0
  %1780 = vmatpush2.msra.mxu0 0.0
  %1781 = vmatprep.subr.mxu0 0.0
  %1782 = vmatpush2.msra.mxu0 0.0
  %1783 = vmatprep.subr.mxu0 0.0
  %1784 = vmatpush2.msra.mxu0 0.0
  %1785 = vmatprep.subr.mxu0 0.0
  %1786 = vmatpush2.msra.mxu0 0.0
  %1787 = vmatprep.subr.mxu0 0.0
  %1788 = vmatpush2.msra.mxu0 0.0
  %1789 = vmatprep.subr.mxu0 0.0
  %1790 = vmatpush2.msra.mxu0 0.0
  %1791 = vmatprep.subr.mxu0 0.0
  %1792 = vmatpush2.msra.mxu0 0.0
  %1793 = vmatprep.subr.mxu0 0.0
  %1794 = vmatpush2.msra.mxu0 0.0
  %1795 = vmatprep.subr.mxu0 0.0
  %1796 = vmatpush2.msra.mxu0 0.0
  %1797 = vmatprep.subr.mxu0 0.0
  %1798 = vmatpush2.msra.mxu0 0.0
  %1799 = vmatprep.subr.mxu0 0.0
  %1800 = vmatpush2.msra.mxu0 0.0
  %1801 = vmatprep.subr.mxu0 0.0
  %1802 = vmatpush2.msra.mxu0 0.0
  %1803 = vmatprep.subr.mxu0 0.0
  %1804 = vmatpush2.msra.mxu0 0.0
  %1805 = vmatprep.mubr.f32.mxu0 0.0
  %1806 = vmatmul.mubr.f32.gmra.mxu0 %v1739
  %v1807 = vpop.f32.mrf.mxu0
  %v1808 = vadd.f32 %v144, %v1807
  %v1809 = vpop.f32.mrf.mxu0
  %1810 = vdwg.mxu0
  %v1811 = vxor.u32 %v1808, 2147483648
  %v1812 = vmul.f32 %v1811, 1.442695
  %v1813 = vpow.pop %v1812
  %v1814 = vadd.f32 %v1813, 1.0
  %v1815 = vrcp.pop %v1814
  %v1816 = vmul.f32 1.0, %v1815
  %v1817 = vtanh.pop %v1808
  %v1818 = vmul.f32 %v1816, %v1720
  %1820 = vrot.lane.b32.xlu0 %v1817, 64
  %v1821 = vpop.permute.xlu0 %1820
  %v1823 = vmul.f32 %v1816, %v1821
  %1825 = vrot.lane.b32.xlu0 %v1823, 32
  %v1826 = vpop.permute.xlu0 %1825
  %v1828 = vadd.f32 %v1818, %v1826
  %v1829 = vtanh.pop %v1828
  %1831 = vrot.lane.b32.xlu0 %v1829, 64
  %v1832 = vpop.permute.xlu0 %1831
  %v1834 = vmul.f32 %v1816, %v1832
  %v1835 = vld [vmem:[%s6] sm:$0x1]
  %v1837 = vlaneseq
  %v1838 = vshrl.u32 %v1837, 7
  %v1839 = vsub.s32 0, %v1838
  %v1840 = vrot.slane %v1835, %v1839
  %1841 = vrot.lane.b32.xlu0 %v1840, 96
  %v1842 = vpop.permute.xlu0 %1841
  %v1844 = vmul.f32 %v1834, %v1842
  %1846 = vrot.lane.b32.xlu0 %v1844, 32
  %v1847 = vpop.permute.xlu0 %1846
  %vm1849 = vcmask 254976
  %v1850 = vsel %vm1849, %v1847, 0.0
  %1851 = vadd.xlane.f32.xlu0 %v1850
  %v1852 = vpop.xlane.xlu0 %1851
  %v1853 = vld [vmem:[#allocation2] sm:$0x1]
  %v1855 = vlaneseq
  %v1856 = vshrl.u32 %v1855, 7
  %v1857 = vsub.s32 0, %v1856
  %v1858 = vrot.slane %v1853, %v1857
  %v1860 = vadd.f32 %v1852, %v1858
  %vm1861 = vcmask 1024
  %1862 = vst.msk [vmem:[%s8] sm:$0x3] %vm1861, %v1860
  // Predicated region
  $region34: #{lstm_model_pallas.1} parent=0 // pred_check
    _
  $region35: #{lstm_model_pallas.1} parent=0 // pred_check_branch
    %1864 = sbr.rel (0) target = $region37
  $region36: #{lstm_model_pallas.1} parent=0 // pred_region
    _
  $region37: #{lstm_model_pallas.1} parent=0 // pred_fallthru
    _
  // Predicated region
  $region38: #{lstm_model_pallas.1} parent=0 // pred_check
    _
  $region39: #{lstm_model_pallas.1} parent=0 // pred_check_branch
    %1866 = sbr.rel (0) target = $region41
  $region40: #{lstm_model_pallas.1} parent=0 // pred_region
    _
  $region41: #{lstm_model_pallas.1} parent=0 // pred_fallthru
    _

</llo_original>
